<compile_context>
chip_gen: v7x
topology: tpu7x:2x2x1
jax: 0.10.0
libtpu: 0.0.40
codegen_flags: <defaults>
</compile_context>

<pallas_src>
import jax
import jax.numpy as jnp
import numpy as np
from jax.experimental import pallas as pl
from jax.experimental.pallas import tpu as pltpu

EPS = 1e-5
LANE = 128


def _round_up(x, m):
    return (x + m - 1) // m * m


def _detect_vmem_limit():
    """Scoped-VMEM limit derived from the actual chip (v7x: 64 MiB, v5e/v6e: 128 MiB)."""
    cap = 64 * 1024 * 1024
    try:
        cap = int(pltpu.get_tpu_info().vmem_capacity_bytes)
    except Exception:
        pass
    return max(32 * 1024 * 1024, min((cap * 3) // 4, 112 * 1024 * 1024))


VMEM_LIMIT = _detect_vmem_limit()
VMEM_BUDGET = (VMEM_LIMIT * 3) // 4   # working-set target when picking tile sizes


def _largest_aligned_divisor(m, cap, align=16):
    """Largest d <= cap with d % align == 0 and m % d == 0 (None if none exists)."""
    cap = min(cap, m)
    best = None
    d = align
    while d <= cap:
        if m % d == 0:
            best = d
        d += align
    return best


# ----------------------------- Pallas kernels --------------------------------
def _make_fused_kernel(tm, m, n_steps):
    """Conv (one packed-K matmul per tile) + batch stats + in-place BN + ReLU."""
    inv_m = 1.0 / float(m)

    def kernel(xcol_ref, w_ref, gamma_ref, beta_ref, o_ref, stats_ref):
        # xcol_ref:  (tm, K_p)      bf16   K-packed (3x3 taps folded into K) input tile
        # w_ref:     (K_p, Cout_p)  bf16   packed weights (resident across the grid)
        # gamma/beta:(1, Cout_p)    f32    BN affine params
        # o_ref:     (M, Cout_p)    bf16   full conv/BN output, resident in VMEM
        # stats_ref: (2, Cout_p)    f32    row0 = sum, row1 = sum of squares (scratch)
        i = pl.program_id(0)

        @pl.when(i == 0)
        def _init():
            stats_ref[...] = jnp.zeros_like(stats_ref)

        acc = jnp.dot(xcol_ref[...], w_ref[...], preferred_element_type=jnp.float32)
        stats_ref[...] = stats_ref[...] + jnp.concatenate(
            [jnp.sum(acc, axis=0, keepdims=True),
             jnp.sum(acc * acc, axis=0, keepdims=True)], axis=0)
        row0 = pl.multiple_of(i * tm, tm)
        o_ref[pl.ds(row0, tm), :] = acc.astype(o_ref.dtype)

        @pl.when(i == n_steps - 1)
        def _finalize():
            mean = stats_ref[0:1, :] * inv_m
            var = jnp.maximum(stats_ref[1:2, :] * inv_m - mean * mean, 0.0)
            scale = gamma_ref[...] * jax.lax.rsqrt(var + EPS)
            shift = beta_ref[...] - mean * scale
            y = o_ref[...].astype(jnp.float32) * scale + shift
            o_ref[...] = jnp.maximum(y, 0.0).astype(o_ref.dtype)

    return kernel


def _conv_stats_kernel(xcol_ref, w_ref, conv_ref, stats_ref):
    """Fallback pass 1: one packed-K matmul per tile + per-channel sum / sum-of-squares."""
    @pl.when(pl.program_id(0) == 0)
    def _init():
        stats_ref[...] = jnp.zeros_like(stats_ref)

    acc = jnp.dot(xcol_ref[...], w_ref[...], preferred_element_type=jnp.float32)
    conv_ref[...] = acc.astype(conv_ref.dtype)              # bf16 intermediate
    stats_ref[...] = stats_ref[...] + jnp.concatenate(
        [jnp.sum(acc, axis=0, keepdims=True),
         jnp.sum(acc * acc, axis=0, keepdims=True)], axis=0)


def _make_bn_relu_kernel(m):
    """Fallback pass 2: fused BatchNorm (training stats) + affine + ReLU, bf16 output."""
    inv_m = 1.0 / float(m)

    def kernel(conv_ref, stats_ref, gamma_ref, beta_ref, o_ref):
        mean = stats_ref[0:1, :] * inv_m
        var = jnp.maximum(stats_ref[1:2, :] * inv_m - mean * mean, 0.0)
        scale = gamma_ref[...] * jax.lax.rsqrt(var + EPS)
        shift = beta_ref[...] - mean * scale
        y = conv_ref[...].astype(jnp.float32) * scale + shift
        o_ref[...] = jnp.maximum(y, 0.0).astype(o_ref.dtype)

    return kernel


# ------------------------------ JAX wrappers ----------------------------------
def conv_bn_relu(x_nhwc, w_oihw, gamma, beta):
    """Conv3x3(pad=1, bias dropped) -> BatchNorm2d(train) -> ReLU.

    Returns (N, H, W, Cout_p) bf16 with Cout lane-padded to a multiple of 128
    (padded channels are exactly zero).
    """
    n, h, w_sp, cin = x_nhwc.shape
    cout = int(w_oihw.shape[0])
    k_real = 9 * cin
    kp = _round_up(k_real, LANE)
    cout_p = _round_up(cout, LANE)
    m = n * h * w_sp

    # ---- parameter packing (glue): (Cout,Cin,3,3) -> (K_p, Cout_p) bf16, K = (ky,kx,ci) ----
    wt = jnp.transpose(w_oihw, (2, 3, 1, 0)).reshape(k_real, cout)
    wt = jnp.pad(wt, ((0, kp - k_real), (0, cout_p - cout))).astype(jnp.bfloat16)
    g = jnp.pad(gamma.astype(jnp.float32), (0, cout_p - cout)).reshape(1, cout_p)
    b = jnp.pad(beta.astype(jnp.float32), (0, cout_p - cout)).reshape(1, cout_p)

    # ---- activation packing: fold the 3x3 taps into the K/lane dim (no halo'd row blocks) ----
    xb = x_nhwc.astype(jnp.bfloat16)
    xp = jnp.pad(xb, ((0, 0), (1, 1), (1, 1), (0, 0)))      # spatial zero pad
    cols = [xp[:, dy:dy + h, dx:dx + w_sp, :] for dy in range(3) for dx in range(3)]
    xcol = jnp.concatenate(cols, axis=-1)                   # (N, H, W, 9*Cin)
    xcol = jnp.pad(xcol, ((0, 0), (0, 0), (0, 0), (0, kp - k_real)))
    xcol = xcol.reshape(m, kp)

    w_bytes = 2 * kp * cout_p * 2          # weight block, double-buffered bf16
    fixed = w_bytes + 64 * 1024            # + stats / gamma / beta / slack
    resident = m * cout_p * 2              # bf16 conv output kept resident in VMEM

    if resident + fixed + 16 * (4 * kp + 4 * cout_p) <= VMEM_BUDGET:
        # -------- fused single-pass kernel (no HBM round trip for the intermediate) --------
        per_row = 4 * kp + 4 * cout_p      # double-buffered bf16 X_col tile + f32 acc
        cap_rows = max(16, (VMEM_BUDGET - resident - fixed) // per_row)
        tm = _largest_aligned_divisor(m, min(cap_rows, 4096)) or m
        n_steps = m // tm
        y = pl.pallas_call(
            _make_fused_kernel(tm, m, n_steps),
            out_shape=jax.ShapeDtypeStruct((m, cout_p), jnp.bfloat16),
            grid=(n_steps,),
            in_specs=[
                pl.BlockSpec((tm, kp), lambda i: (i, 0)),
                pl.BlockSpec((kp, cout_p), lambda i: (0, 0)),
                pl.BlockSpec((1, cout_p), lambda i: (0, 0)),
                pl.BlockSpec((1, cout_p), lambda i: (0, 0)),
            ],
            out_specs=pl.BlockSpec((m, cout_p), lambda i: (0, 0)),
            scratch_shapes=[pltpu.VMEM((2, cout_p), jnp.float32)],
            compiler_params=pltpu.CompilerParams(
                dimension_semantics=("arbitrary",),     # resident output + stats accumulation
                vmem_limit_bytes=VMEM_LIMIT,
            ),
        )(xcol, wt, g, b)
    else:
        # -------- fallback: two passes, bf16 intermediate --------
        per_row1 = 4 * kp + 8 * cout_p     # xcol db + conv-out db (bf16) + f32 acc
        cap1 = max(16, (VMEM_BUDGET - fixed) // per_row1)
        tm1 = _largest_aligned_divisor(m, min(cap1, 4096)) or m
        conv, stats = pl.pallas_call(
            _conv_stats_kernel,
            out_shape=(jax.ShapeDtypeStruct((m, cout_p), jnp.bfloat16),
                       jax.ShapeDtypeStruct((2, cout_p), jnp.float32)),
            grid=(m // tm1,),
            in_specs=[
                pl.BlockSpec((tm1, kp), lambda i: (i, 0)),
                pl.BlockSpec((kp, cout_p), lambda i: (0, 0)),
            ],
            out_specs=(
                pl.BlockSpec((tm1, cout_p), lambda i: (i, 0)),
                pl.BlockSpec((2, cout_p), lambda i: (0, 0)),
            ),
            compiler_params=pltpu.CompilerParams(
                dimension_semantics=("arbitrary",),
                vmem_limit_bytes=VMEM_LIMIT,
            ),
        )(xcol, wt)

        per_row2 = 8 * cout_p              # conv in + out, bf16, double-buffered
        cap2 = max(16, VMEM_BUDGET // per_row2)
        tm2 = _largest_aligned_divisor(m, min(cap2, 16384)) or m
        y = pl.pallas_call(
            _make_bn_relu_kernel(m),
            out_shape=jax.ShapeDtypeStruct((m, cout_p), jnp.bfloat16),
            grid=(m // tm2,),
            in_specs=[
                pl.BlockSpec((tm2, cout_p), lambda i: (i, 0)),
                pl.BlockSpec((2, cout_p), lambda i: (0, 0)),
                pl.BlockSpec((1, cout_p), lambda i: (0, 0)),
                pl.BlockSpec((1, cout_p), lambda i: (0, 0)),
            ],
            out_specs=pl.BlockSpec((tm2, cout_p), lambda i: (i, 0)),
            compiler_params=pltpu.CompilerParams(
                dimension_semantics=("parallel",),
                vmem_limit_bytes=VMEM_LIMIT,
            ),
        )(conv, stats, g, b)

    return y.reshape(n, h, w_sp, cout_p)


def double_conv(x_nchw, params):
    """DoubleConv forward. Input/output are NCHW to match PyTorch."""
    cmid = int(params["w1"].shape[0])
    cout = int(params["w2"].shape[0])
    x = jnp.transpose(x_nchw, (0, 2, 3, 1))                 # NCHW -> NHWC, once
    # Conv biases (b1/b2) are intentionally unused: a constant per-channel shift is
    # exactly cancelled by training-mode BatchNorm's mean subtraction.
    y = conv_bn_relu(x, params["w1"], params["g1"], params["be1"])[..., :cmid]
    y = conv_bn_relu(y, params["w2"], params["g2"], params["be2"])[..., :cout]
    return jnp.transpose(y.astype(jnp.float32), (0, 3, 1, 2))   # NHWC -> NCHW


# ---------------------------- pure-JAX reference ------------------------------
def _ref_layer(x_nchw, w_oihw, bias, gamma, beta):
    y = jax.lax.conv_general_dilated(
        x_nchw, w_oihw, window_strides=(1, 1), padding=((1, 1), (1, 1)),
        dimension_numbers=("NCHW", "OIHW", "NCHW"))
    y = y + bias[None, :, None, None]
    mean = jnp.mean(y, axis=(0, 2, 3), keepdims=True)
    var = jnp.mean((y - mean) ** 2, axis=(0, 2, 3), keepdims=True)
    y = (y - mean) * jax.lax.rsqrt(var + EPS)
    y = y * gamma[None, :, None, None] + beta[None, :, None, None]
    return jnp.maximum(y, 0.0)


def double_conv_ref(x_nchw, params):
    y = _ref_layer(x_nchw, params["w1"], params["b1"], params["g1"], params["be1"])
    y = _ref_layer(y, params["w2"], params["b2"], params["g2"], params["be2"])
    return y


# ----------------------------------- main -------------------------------------
if __name__ == "__main__":
    key = jax.random.PRNGKey(0)
    N, C_IN, H, W = 2, 4, 16, 16
    C_OUT = 8
    C_MID = C_OUT                                # mid_channels defaults to out_channels

    k = jax.random.split(key, 5)
    x = jax.random.normal(k[0], (N, C_IN, H, W), dtype=jnp.float32)

    params = {
        "w1": 0.1 * jax.random.normal(k[1], (C_MID, C_IN, 3, 3), dtype=jnp.float32),
        "b1": 0.1 * jax.random.normal(k[2], (C_MID,), dtype=jnp.float32),
        "g1": jnp.ones((C_MID,), jnp.float32),   # BatchNorm2d default weight
        "be1": jnp.zeros((C_MID,), jnp.float32), # BatchNorm2d default bias
        "w2": 0.1 * jax.random.normal(k[3], (C_OUT, C_MID, 3, 3), dtype=jnp.float32),
        "b2": 0.1 * jax.random.normal(k[4], (C_OUT,), dtype=jnp.float32),
        "g2": jnp.ones((C_OUT,), jnp.float32),
        "be2": jnp.zeros((C_OUT,), jnp.float32),
    }

    out = jax.block_until_ready(jax.jit(double_conv)(x, params))
    ref = jax.block_until_ready(double_conv_ref(x, params))

    assert out.shape == (N, C_OUT, H, W), out.shape
    assert bool(jnp.all(jnp.isfinite(out)))
    np.testing.assert_allclose(np.asarray(out), np.asarray(ref), rtol=5e-2, atol=5e-2)

    print("KERNEL_OK")
</pallas_src>

<mosaic_0001>
module attributes {stable_mosaic.version = 11 : i64} {
  func.func @kernel(%arg0: i32, %arg1: memref<512x128xbf16, #tpu.memory_space<vmem>>, %arg2: memref<128x128xbf16, #tpu.memory_space<vmem>>, %arg3: memref<1x128xf32, #tpu.memory_space<vmem>>, %arg4: memref<1x128xf32, #tpu.memory_space<vmem>>, %arg5: memref<512x128xbf16, #tpu.memory_space<vmem>>, %arg6: memref<2x128xf32, #tpu.memory_space<vmem>>) attributes {dimension_semantics = [#tpu.dimension_semantics<arbitrary>], iteration_bounds = array<i64: 1>, scalar_prefetch = 0 : i64, scratch_operands = 1 : i64, tpu.core_type = #tpu.core_type<tc>, window_params = [{transform_indices = @transform_0, window_bounds = array<i64: 512, 128>}, {pipeline_mode = #tpu.pipeline_mode<synchronous>, transform_indices = @transform_1, window_bounds = array<i64: 128, 128>}, {pipeline_mode = #tpu.pipeline_mode<synchronous>, transform_indices = @transform_2, window_bounds = array<i64: 1, 128>}, {pipeline_mode = #tpu.pipeline_mode<synchronous>, transform_indices = @transform_3, window_bounds = array<i64: 1, 128>}, {pipeline_mode = #tpu.pipeline_mode<synchronous>, transform_indices = @transform_4, window_bounds = array<i64: 512, 128>}]} {
    %c0_i32 = arith.constant 0 : i32
    %0 = arith.cmpi eq, %arg0, %c0_i32 : i32
    %1 = arith.extui %0 : i1 to i32
    %c0_i32_0 = arith.constant 0 : i32
    %2 = arith.cmpi ne, %1, %c0_i32_0 : i32
    scf.if %2 {
      %cst_13 = arith.constant 0.000000e+00 : f32
      %23 = vector.broadcast %cst_13 : f32 to vector<2x128xf32>
      %c0_14 = arith.constant 0 : index
      %c0_15 = arith.constant 0 : index
      %24 = vector.load %arg6[%c0_14, %c0_15] : memref<2x128xf32, #tpu.memory_space<vmem>>, vector<2x128xf32>
      tpu.vector_store %arg6[%c0_14, %c0_15], %23 {strides = array<i32>} : memref<2x128xf32, #tpu.memory_space<vmem>>, vector<2x128xf32>,
    } else {
    }
    %c0 = arith.constant 0 : index
    %c0_1 = arith.constant 0 : index
    %3 = vector.load %arg1[%c0, %c0_1] : memref<512x128xbf16, #tpu.memory_space<vmem>>, vector<512x128xbf16>
    %c0_2 = arith.constant 0 : index
    %c0_3 = arith.constant 0 : index
    %4 = vector.load %arg2[%c0_2, %c0_3] : memref<128x128xbf16, #tpu.memory_space<vmem>>, vector<128x128xbf16>
    %cst = arith.constant dense<0.000000e+00> : vector<512x128xf32>
    %5 = tpu.matmul %3, %4, %cst {dimension_numbers = #tpu.dot_dimension_numbers<[1], [0], [0], [1], [0, 0, 1, 1], [], []>} : vector<512x128xbf16>, vector<128x128xbf16>, vector<512x128xf32> -> vector<512x128xf32>
    %c0_4 = arith.constant 0 : index
    %c0_5 = arith.constant 0 : index
    %6 = vector.load %arg6[%c0_4, %c0_5] : memref<2x128xf32, #tpu.memory_space<vmem>>, vector<2x128xf32>
    %cst_6 = arith.constant dense<0.000000e+00> : vector<128xf32>
    %7 = vector.multi_reduction <add>, %5, %cst_6 [0] : vector<512x128xf32> to vector<128xf32>
    %8 = vector.shape_cast %7 : vector<128xf32> to vector<1x128xf32>
    %9 = arith.mulf %5, %5 : vector<512x128xf32>
    %cst_7 = arith.constant dense<0.000000e+00> : vector<128xf32>
    %10 = vector.multi_reduction <add>, %9, %cst_7 [0] : vector<512x128xf32> to vector<128xf32>
    %11 = vector.shape_cast %10 : vector<128xf32> to vector<1x128xf32>
    %12 = tpu.concatenate %8, %11 in 0 : vector<1x128xf32>, vector<1x128xf32> -> vector<2x128xf32>
    %13 = arith.addf %6, %12 : vector<2x128xf32>
    %c0_8 = arith.constant 0 : index
    %c0_9 = arith.constant 0 : index
    %14 = vector.load %arg6[%c0_8, %c0_9] : memref<2x128xf32, #tpu.memory_space<vmem>>, vector<2x128xf32>
    tpu.vector_store %arg6[%c0_8, %c0_9], %13 {strides = array<i32>} : memref<2x128xf32, #tpu.memory_space<vmem>>, vector<2x128xf32>,
    %c512_i32 = arith.constant 512 : i32
    %15 = arith.muli %arg0, %c512_i32 : i32
    %16 = tpu.assume_multiple %15, 512 : i32
    %17 = arith.truncf %5 : vector<512x128xf32> to vector<512x128xbf16>
    %18 = arith.index_cast %16 : i32 to index
    %c0_10 = arith.constant 0 : index
    %19 = vector.load %arg5[%18, %c0_10] : memref<512x128xbf16, #tpu.memory_space<vmem>>, vector<512x128xbf16>
    tpu.vector_store %arg5[%18, %c0_10], %17 {strides = array<i32>} : memref<512x128xbf16, #tpu.memory_space<vmem>>, vector<512x128xbf16>,
    %c0_i32_11 = arith.constant 0 : i32
    %20 = arith.cmpi eq, %arg0, %c0_i32_11 : i32
    %21 = arith.extui %20 : i1 to i32
    %c0_i32_12 = arith.constant 0 : i32
    %22 = arith.cmpi ne, %21, %c0_i32_12 : i32
    scf.if %22 {
      %c0_13 = arith.constant 0 : index
      %c0_14 = arith.constant 0 : index
      %23 = vector.load %arg6[%c0_13, %c0_14] : memref<2x128xf32, #tpu.memory_space<vmem>>, vector<1x128xf32>
      %cst_15 = arith.constant 0.001953125 : f32
      %24 = vector.broadcast %cst_15 : f32 to vector<1x128xf32>
      %25 = arith.mulf %23, %24 : vector<1x128xf32>
      %c1 = arith.constant 1 : index
      %c0_16 = arith.constant 0 : index
      %26 = vector.load %arg6[%c1, %c0_16] : memref<2x128xf32, #tpu.memory_space<vmem>>, vector<1x128xf32>
      %cst_17 = arith.constant 0.001953125 : f32
      %27 = vector.broadcast %cst_17 : f32 to vector<1x128xf32>
      %28 = arith.mulf %26, %27 : vector<1x128xf32>
      %29 = arith.mulf %25, %25 : vector<1x128xf32>
      %30 = arith.subf %28, %29 : vector<1x128xf32>
      %cst_18 = arith.constant 0.000000e+00 : f32
      %31 = vector.broadcast %cst_18 : f32 to vector<1x128xf32>
      %32 = arith.maximumf %30, %31 : vector<1x128xf32>
      %c0_19 = arith.constant 0 : index
      %c0_20 = arith.constant 0 : index
      %33 = vector.load %arg3[%c0_19, %c0_20] : memref<1x128xf32, #tpu.memory_space<vmem>>, vector<1x128xf32>
      %cst_21 = arith.constant 9.99999974E-6 : f32
      %34 = vector.broadcast %cst_21 : f32 to vector<1x128xf32>
      %35 = arith.addf %32, %34 : vector<1x128xf32>
      %36 = math.rsqrt %35 : vector<1x128xf32>
      %37 = arith.mulf %33, %36 : vector<1x128xf32>
      %c0_22 = arith.constant 0 : index
      %c0_23 = arith.constant 0 : index
      %38 = vector.load %arg4[%c0_22, %c0_23] : memref<1x128xf32, #tpu.memory_space<vmem>>, vector<1x128xf32>
      %39 = arith.mulf %25, %37 : vector<1x128xf32>
      %40 = arith.subf %38, %39 : vector<1x128xf32>
      %c0_24 = arith.constant 0 : index
      %c0_25 = arith.constant 0 : index
      %41 = vector.load %arg5[%c0_24, %c0_25] : memref<512x128xbf16, #tpu.memory_space<vmem>>, vector<512x128xbf16>
      %42 = arith.extf %41 : vector<512x128xbf16> to vector<512x128xf32>
      %43 = vector.broadcast %37 : vector<1x128xf32> to vector<512x128xf32>
      %44 = arith.mulf %42, %43 : vector<512x128xf32>
      %45 = vector.broadcast %40 : vector<1x128xf32> to vector<512x128xf32>
      %46 = arith.addf %44, %45 : vector<512x128xf32>
      %cst_26 = arith.constant 0.000000e+00 : f32
      %47 = vector.broadcast %cst_26 : f32 to vector<512x128xf32>
      %48 = arith.maximumf %46, %47 : vector<512x128xf32>
      %49 = arith.truncf %48 : vector<512x128xf32> to vector<512x128xbf16>
      %c0_27 = arith.constant 0 : index
      %c0_28 = arith.constant 0 : index
      %50 = vector.load %arg5[%c0_27, %c0_28] : memref<512x128xbf16, #tpu.memory_space<vmem>>, vector<512x128xbf16>
      tpu.vector_store %arg5[%c0_27, %c0_28], %49 {strides = array<i32>} : memref<512x128xbf16, #tpu.memory_space<vmem>>, vector<512x128xbf16>,
    } else {
    }
    return
  }
  func.func @transform_0(%arg0: i32) -> (i32, i32) {
    %c0_i32 = arith.constant 0 : i32
    %c0_i32_0 = arith.constant 0 : i32
    return %arg0, %c0_i32 : i32, i32
  }
  func.func @transform_1(%arg0: i32) -> (i32, i32) {
    %c0_i32 = arith.constant 0 : i32
    %c0_i32_0 = arith.constant 0 : i32
    %c0_i32_1 = arith.constant 0 : i32
    return %c0_i32, %c0_i32_0 : i32, i32
  }
  func.func @transform_2(%arg0: i32) -> (i32, i32) {
    %c0_i32 = arith.constant 0 : i32
    %c0_i32_0 = arith.constant 0 : i32
    %c0_i32_1 = arith.constant 0 : i32
    return %c0_i32, %c0_i32_0 : i32, i32
  }
  func.func @transform_3(%arg0: i32) -> (i32, i32) {
    %c0_i32 = arith.constant 0 : i32
    %c0_i32_0 = arith.constant 0 : i32
    %c0_i32_1 = arith.constant 0 : i32
    return %c0_i32, %c0_i32_0 : i32, i32
  }
  func.func @transform_4(%arg0: i32) -> (i32, i32) {
    %c0_i32 = arith.constant 0 : i32
    %c0_i32_0 = arith.constant 0 : i32
    %c0_i32_1 = arith.constant 0 : i32
    return %c0_i32, %c0_i32_0 : i32, i32
  }
}

</mosaic_0001>

<llo_original>
// kernel: double_conv.2
$region0: #{double_conv.2}
  #allocation0 [shape = 'u32[]', space=smem, size = 0x4, offset = 0x4, fixed_abs, tag = 'smem constant byte address 0x4 - core index']
  #allocation1 [shape = 'u32[144,128]{1,0:T(1,128)}', space=vmem, size = 0x12000, scoped, tag = 'internal scratch']
  #allocation2 [shape = 'f32[2,128]{1,0:T(2,128)}', space=vmem, size = 0x400, scoped, tag = 'scratch operand']
  %s0 = inlined_call_operand.vmem [shape: bf16[512,128], index: 0, kind: input, shape index: {}]
  %s1 = inlined_call_operand.vmem [shape: bf16[128,128], index: 1, kind: input, shape index: {}]
  %s2 = inlined_call_operand.vmem [shape: f32[1,128], index: 2, kind: input, shape index: {}]
  %s3 = inlined_call_operand.vmem [shape: f32[1,128], index: 3, kind: input, shape index: {}]
  %s4 = inlined_call_operand.vmem [shape: bf16[512,128], index: 4, kind: output, shape index: {}]
  %s5 = sld [smem:[#allocation0]]
  $region34: #{double_conv.2} parent=0
    _
  %s7 = ssub.s32 1, %s5
  %s8 = scalar_select 0, %s7, %s5
  // Predicated region
  $region2: #{double_conv.2} parent=0 // pred_check
    _
  $region3: #{double_conv.2} parent=0 // pred_check_branch
    %10 = sbr.rel (0) target = $region5
  $region4: #{double_conv.2} parent=0 // pred_region
    _
  $region5: #{double_conv.2} parent=0 // pred_fallthru
    _
  // Predicated region
  $region6: #{double_conv.2} parent=0 // pred_check
    _
  $region7: #{double_conv.2} parent=0 // pred_check_branch
    %12 = sbr.rel (0) target = $region9
  $region8: #{double_conv.2} parent=0 // pred_region
    _
  $region9: #{double_conv.2} parent=0 // pred_fallthru
    _
  // Predicated region
  $region10: #{double_conv.2} parent=0 // pred_check
    _
  $region11: #{double_conv.2} parent=0 // pred_check_branch
    %14 = sbr.rel (0) target = $region13
  $region12: #{double_conv.2} parent=0 // pred_region
    _
  $region13: #{double_conv.2} parent=0 // pred_fallthru
    _
  // Predicated region
  $region14: #{double_conv.2} parent=0 // pred_check
    _
  $region15: #{double_conv.2} parent=0 // pred_check_branch
    %16 = sbr.rel (0) target = $region17
  $region16: #{double_conv.2} parent=0 // pred_region
    _
  $region17: #{double_conv.2} parent=0 // pred_fallthru
    _
  %p18 = scmp.eq.s32.totalorder 0, 0
  // Predicated region
  $region18: #{double_conv.2} parent=0 // pred_check
    %p19 = pneg %p18
  $region19: #{double_conv.2} parent=0 // pred_check_branch
    %21 = sbr.rel (%p19) target = $region21
  $region20: #{double_conv.2} parent=0 // pred_region
    %22 = vst [vmem:[#allocation2] sm:$0x3] 0.0
  $region21: #{double_conv.2} parent=0 // pred_fallthru
    _
  %v23 = vld [vmem:[%s0] sm:$0xf]
  %v24 = vld [vmem:[%s0 + $0x4] sm:$0xf]
  %v25 = vld [vmem:[%s0 + $0x8] sm:$0xf]
  %v26 = vld [vmem:[%s0 + $0xc] sm:$0xf]
  %v27 = vld [vmem:[%s0 + $0x10] sm:$0xf]
  %v28 = vld [vmem:[%s0 + $0x14] sm:$0xf]
  %v29 = vld [vmem:[%s0 + $0x18] sm:$0xf]
  %v30 = vld [vmem:[%s0 + $0x1c] sm:$0xf]
  %v31 = vld [vmem:[%s0 + $0x20] sm:$0xf]
  %v32 = vld [vmem:[%s0 + $0x24] sm:$0xf]
  %v33 = vld [vmem:[%s0 + $0x28] sm:$0xf]
  %v34 = vld [vmem:[%s0 + $0x2c] sm:$0xf]
  %v35 = vld [vmem:[%s0 + $0x30] sm:$0xf]
  %v36 = vld [vmem:[%s0 + $0x34] sm:$0xf]
  %v37 = vld [vmem:[%s0 + $0x38] sm:$0xf]
  %v38 = vld [vmem:[%s0 + $0x3c] sm:$0xf]
  %v39 = vld [vmem:[%s0 + $0x40] sm:$0xf]
  %v40 = vld [vmem:[%s0 + $0x44] sm:$0xf]
  %v41 = vld [vmem:[%s0 + $0x48] sm:$0xf]
  %v42 = vld [vmem:[%s0 + $0x4c] sm:$0xf]
  %v43 = vld [vmem:[%s0 + $0x50] sm:$0xf]
  %v44 = vld [vmem:[%s0 + $0x54] sm:$0xf]
  %v45 = vld [vmem:[%s0 + $0x58] sm:$0xf]
  %v46 = vld [vmem:[%s0 + $0x5c] sm:$0xf]
  %v47 = vld [vmem:[%s0 + $0x60] sm:$0xf]
  %v48 = vld [vmem:[%s0 + $0x64] sm:$0xf]
  %v49 = vld [vmem:[%s0 + $0x68] sm:$0xf]
  %v50 = vld [vmem:[%s0 + $0x6c] sm:$0xf]
  %v51 = vld [vmem:[%s0 + $0x70] sm:$0xf]
  %v52 = vld [vmem:[%s0 + $0x74] sm:$0xf]
  %v53 = vld [vmem:[%s0 + $0x78] sm:$0xf]
  %v54 = vld [vmem:[%s0 + $0x7c] sm:$0xf]
  %v55 = vld [vmem:[%s0 + $0x80] sm:$0xf]
  %v56 = vld [vmem:[%s0 + $0x84] sm:$0xf]
  %v57 = vld [vmem:[%s0 + $0x88] sm:$0xf]
  %v58 = vld [vmem:[%s0 + $0x8c] sm:$0xf]
  %v59 = vld [vmem:[%s0 + $0x90] sm:$0xf]
  %v60 = vld [vmem:[%s0 + $0x94] sm:$0xf]
  %v61 = vld [vmem:[%s0 + $0x98] sm:$0xf]
  %v62 = vld [vmem:[%s0 + $0x9c] sm:$0xf]
  %v63 = vld [vmem:[%s0 + $0xa0] sm:$0xf]
  %v64 = vld [vmem:[%s0 + $0xa4] sm:$0xf]
  %v65 = vld [vmem:[%s0 + $0xa8] sm:$0xf]
  %v66 = vld [vmem:[%s0 + $0xac] sm:$0xf]
  %v67 = vld [vmem:[%s0 + $0xb0] sm:$0xf]
  %v68 = vld [vmem:[%s0 + $0xb4] sm:$0xf]
  %v69 = vld [vmem:[%s0 + $0xb8] sm:$0xf]
  %v70 = vld [vmem:[%s0 + $0xbc] sm:$0xf]
  %v71 = vld [vmem:[%s0 + $0xc0] sm:$0xf]
  %v72 = vld [vmem:[%s0 + $0xc4] sm:$0xf]
  %v73 = vld [vmem:[%s0 + $0xc8] sm:$0xf]
  %v74 = vld [vmem:[%s0 + $0xcc] sm:$0xf]
  %v75 = vld [vmem:[%s0 + $0xd0] sm:$0xf]
  %v76 = vld [vmem:[%s0 + $0xd4] sm:$0xf]
  %v77 = vld [vmem:[%s0 + $0xd8] sm:$0xf]
  %v78 = vld [vmem:[%s0 + $0xdc] sm:$0xf]
  %v79 = vld [vmem:[%s0 + $0xe0] sm:$0xf]
  %v80 = vld [vmem:[%s0 + $0xe4] sm:$0xf]
  %v81 = vld [vmem:[%s0 + $0xe8] sm:$0xf]
  %v82 = vld [vmem:[%s0 + $0xec] sm:$0xf]
  %v83 = vld [vmem:[%s0 + $0xf0] sm:$0xf]
  %v84 = vld [vmem:[%s0 + $0xf4] sm:$0xf]
  %v85 = vld [vmem:[%s0 + $0xf8] sm:$0xf]
  %v86 = vld [vmem:[%s0 + $0xfc] sm:$0xf]
  %v87 = vld [vmem:[%s1] sm:$0xf]
  %v88 = vld [vmem:[%s1 + $0x4] sm:$0xf]
  %v89 = vld [vmem:[%s1 + $0x8] sm:$0xf]
  %v90 = vld [vmem:[%s1 + $0xc] sm:$0xf]
  %v91 = vld [vmem:[%s1 + $0x10] sm:$0xf]
  %v92 = vld [vmem:[%s1 + $0x14] sm:$0xf]
  %v93 = vld [vmem:[%s1 + $0x18] sm:$0xf]
  %v94 = vld [vmem:[%s1 + $0x1c] sm:$0xf]
  %v95 = vld [vmem:[%s1 + $0x20] sm:$0xf]
  %v96 = vld [vmem:[%s1 + $0x24] sm:$0xf]
  %v97 = vld [vmem:[%s1 + $0x28] sm:$0xf]
  %v98 = vld [vmem:[%s1 + $0x2c] sm:$0xf]
  %v99 = vld [vmem:[%s1 + $0x30] sm:$0xf]
  %v100 = vld [vmem:[%s1 + $0x34] sm:$0xf]
  %v101 = vld [vmem:[%s1 + $0x38] sm:$0xf]
  %v102 = vld [vmem:[%s1 + $0x3c] sm:$0xf]
  %v167 = vunpack.c.l.b16 %v23
  %v168 = vunpack.c.l.b16 %v24
  %v169 = vunpack.c.l.b16 %v25
  %v170 = vunpack.c.l.b16 %v26
  %v171 = vunpack.c.l.b16 %v27
  %v172 = vunpack.c.l.b16 %v28
  %v173 = vunpack.c.l.b16 %v29
  %v174 = vunpack.c.l.b16 %v30
  %v175 = vunpack.c.l.b16 %v31
  %v176 = vunpack.c.l.b16 %v32
  %v177 = vunpack.c.l.b16 %v33
  %v178 = vunpack.c.l.b16 %v34
  %v179 = vunpack.c.l.b16 %v35
  %v180 = vunpack.c.l.b16 %v36
  %v181 = vunpack.c.l.b16 %v37
  %v182 = vunpack.c.l.b16 %v38
  %v183 = vunpack.c.l.b16 %v39
  %v184 = vunpack.c.l.b16 %v40
  %v185 = vunpack.c.l.b16 %v41
  %v186 = vunpack.c.l.b16 %v42
  %v187 = vunpack.c.l.b16 %v43
  %v188 = vunpack.c.l.b16 %v44
  %v189 = vunpack.c.l.b16 %v45
  %v190 = vunpack.c.l.b16 %v46
  %v191 = vunpack.c.l.b16 %v47
  %v192 = vunpack.c.l.b16 %v48
  %v193 = vunpack.c.l.b16 %v49
  %v194 = vunpack.c.l.b16 %v50
  %v195 = vunpack.c.l.b16 %v51
  %v196 = vunpack.c.l.b16 %v52
  %v197 = vunpack.c.l.b16 %v53
  %v198 = vunpack.c.l.b16 %v54
  %v199 = vunpack.c.l.b16 %v55
  %v200 = vunpack.c.l.b16 %v56
  %v201 = vunpack.c.l.b16 %v57
  %v202 = vunpack.c.l.b16 %v58
  %v203 = vunpack.c.l.b16 %v59
  %v204 = vunpack.c.l.b16 %v60
  %v205 = vunpack.c.l.b16 %v61
  %v206 = vunpack.c.l.b16 %v62
  %v207 = vunpack.c.l.b16 %v63
  %v208 = vunpack.c.l.b16 %v64
  %v209 = vunpack.c.l.b16 %v65
  %v210 = vunpack.c.l.b16 %v66
  %v211 = vunpack.c.l.b16 %v67
  %v212 = vunpack.c.l.b16 %v68
  %v213 = vunpack.c.l.b16 %v69
  %v214 = vunpack.c.l.b16 %v70
  %v215 = vunpack.c.l.b16 %v71
  %v216 = vunpack.c.l.b16 %v72
  %v217 = vunpack.c.l.b16 %v73
  %v218 = vunpack.c.l.b16 %v74
  %v219 = vunpack.c.l.b16 %v75
  %v220 = vunpack.c.l.b16 %v76
  %v221 = vunpack.c.l.b16 %v77
  %v222 = vunpack.c.l.b16 %v78
  %v223 = vunpack.c.l.b16 %v79
  %v224 = vunpack.c.l.b16 %v80
  %v225 = vunpack.c.l.b16 %v81
  %v226 = vunpack.c.l.b16 %v82
  %v227 = vunpack.c.l.b16 %v83
  %v228 = vunpack.c.l.b16 %v84
  %v229 = vunpack.c.l.b16 %v85
  %v230 = vunpack.c.l.b16 %v86
  %v231 = vpack.c.b16 %v168, %v167
  %v232 = vpack.c.b16 %v170, %v169
  %v233 = vpack.c.b16 %v172, %v171
  %v234 = vpack.c.b16 %v174, %v173
  %v235 = vpack.c.b16 %v176, %v175
  %v236 = vpack.c.b16 %v178, %v177
  %v237 = vpack.c.b16 %v180, %v179
  %v238 = vpack.c.b16 %v182, %v181
  %v239 = vpack.c.b16 %v184, %v183
  %v240 = vpack.c.b16 %v186, %v185
  %v241 = vpack.c.b16 %v188, %v187
  %v242 = vpack.c.b16 %v190, %v189
  %v243 = vpack.c.b16 %v192, %v191
  %v244 = vpack.c.b16 %v194, %v193
  %v245 = vpack.c.b16 %v196, %v195
  %v246 = vpack.c.b16 %v198, %v197
  %v247 = vpack.c.b16 %v200, %v199
  %v248 = vpack.c.b16 %v202, %v201
  %v249 = vpack.c.b16 %v204, %v203
  %v250 = vpack.c.b16 %v206, %v205
  %v251 = vpack.c.b16 %v208, %v207
  %v252 = vpack.c.b16 %v210, %v209
  %v253 = vpack.c.b16 %v212, %v211
  %v254 = vpack.c.b16 %v214, %v213
  %v255 = vpack.c.b16 %v216, %v215
  %v256 = vpack.c.b16 %v218, %v217
  %v257 = vpack.c.b16 %v220, %v219
  %v258 = vpack.c.b16 %v222, %v221
  %v259 = vpack.c.b16 %v224, %v223
  %v260 = vpack.c.b16 %v226, %v225
  %v261 = vpack.c.b16 %v228, %v227
  %v262 = vpack.c.b16 %v230, %v229
  %v311 = vunpack.c.l.b16 %v87
  %v312 = vunpack.c.l.b16 %v88
  %v313 = vunpack.c.l.b16 %v89
  %v314 = vunpack.c.l.b16 %v90
  %v315 = vunpack.c.l.b16 %v91
  %v316 = vunpack.c.l.b16 %v92
  %v317 = vunpack.c.l.b16 %v93
  %v318 = vunpack.c.l.b16 %v94
  %v319 = vunpack.c.l.b16 %v95
  %v320 = vunpack.c.l.b16 %v96
  %v321 = vunpack.c.l.b16 %v97
  %v322 = vunpack.c.l.b16 %v98
  %v323 = vunpack.c.l.b16 %v99
  %v324 = vunpack.c.l.b16 %v100
  %v325 = vunpack.c.l.b16 %v101
  %v326 = vunpack.c.l.b16 %v102
  %v327 = vpack.c.b16 %v312, %v311
  %v328 = vpack.c.b16 %v314, %v313
  %v329 = vpack.c.b16 %v316, %v315
  %v330 = vpack.c.b16 %v318, %v317
  %v331 = vpack.c.b16 %v320, %v319
  %v332 = vpack.c.b16 %v322, %v321
  %v333 = vpack.c.b16 %v324, %v323
  %v334 = vpack.c.b16 %v326, %v325
  %343 = vmatprep.subr.bf16.mxu0 0
  %344 = vmatpush1.bf16.msra.mxu0 %v327
  %345 = vmatprep.subr.bf16.mxu0 0
  %346 = vmatpush1.bf16.msra.mxu0 %v328
  %347 = vmatprep.subr.bf16.mxu0 0
  %348 = vmatpush1.bf16.msra.mxu0 %v329
  %349 = vmatprep.subr.bf16.mxu0 0
  %350 = vmatpush1.bf16.msra.mxu0 %v330
  %351 = vmatprep.subr.bf16.mxu0 0
  %352 = vmatpush1.bf16.msra.mxu0 %v331
  %353 = vmatprep.subr.bf16.mxu0 0
  %354 = vmatpush1.bf16.msra.mxu0 %v332
  %355 = vmatprep.subr.bf16.mxu0 0
  %356 = vmatpush1.bf16.msra.mxu0 %v333
  %357 = vmatprep.subr.bf16.mxu0 0
  %358 = vmatpush1.bf16.msra.mxu0 %v334
  %359 = vmatprep.subr.bf16.mxu0 0
  %360 = vmatpush1.bf16.msra.mxu0 0
  %361 = vmatprep.subr.bf16.mxu0 0
  %362 = vmatpush1.bf16.msra.mxu0 0
  %363 = vmatprep.subr.bf16.mxu0 0
  %364 = vmatpush1.bf16.msra.mxu0 0
  %365 = vmatprep.subr.bf16.mxu0 0
  %366 = vmatpush1.bf16.msra.mxu0 0
  %367 = vmatprep.subr.bf16.mxu0 0
  %368 = vmatpush1.bf16.msra.mxu0 0
  %369 = vmatprep.subr.bf16.mxu0 0
  %370 = vmatpush1.bf16.msra.mxu0 0
  %371 = vmatprep.subr.bf16.mxu0 0
  %372 = vmatpush1.bf16.msra.mxu0 0
  %373 = vmatprep.subr.bf16.mxu0 0
  %374 = vmatpush1.bf16.msra.mxu0 0
  %375 = vmatprep.mubr.bf16.mxu0 0
  %376 = vmatmul.mubr.bf16.gmra.mrb[0].mxu0 %v231
  %v377 = vpop.f32.mrb[0].mxu0
  %v378 = vadd.f32 0.0, %v377
  %v379 = vpop.f32.mrb[0].mxu0
  %v380 = vpop.f32.mrb[0].mxu0
  %v381 = vadd.f32 0.0, %v380
  %v382 = vpop.f32.mrb[0].mxu0
  %383 = vmatprep.mubr.bf16.mxu0 0
  %384 = vmatmul.mubr.bf16.gmra.mrb[0].mxu0 %v232
  %v385 = vpop.f32.mrb[0].mxu0
  %v386 = vadd.f32 0.0, %v385
  %v387 = vpop.f32.mrb[0].mxu0
  %v388 = vpop.f32.mrb[0].mxu0
  %v389 = vadd.f32 0.0, %v388
  %v390 = vpop.f32.mrb[0].mxu0
  %391 = vmatprep.mubr.bf16.mxu0 0
  %392 = vmatmul.mubr.bf16.gmra.mrb[0].mxu0 %v233
  %v393 = vpop.f32.mrb[0].mxu0
  %v394 = vadd.f32 0.0, %v393
  %v395 = vpop.f32.mrb[0].mxu0
  %v396 = vpop.f32.mrb[0].mxu0
  %v397 = vadd.f32 0.0, %v396
  %v398 = vpop.f32.mrb[0].mxu0
  %399 = vmatprep.mubr.bf16.mxu0 0
  %400 = vmatmul.mubr.bf16.gmra.mrb[0].mxu0 %v234
  %v401 = vpop.f32.mrb[0].mxu0
  %v402 = vadd.f32 0.0, %v401
  %v403 = vpop.f32.mrb[0].mxu0
  %v404 = vpop.f32.mrb[0].mxu0
  %v405 = vadd.f32 0.0, %v404
  %v406 = vpop.f32.mrb[0].mxu0
  %407 = vmatprep.mubr.bf16.mxu0 0
  %408 = vmatmul.mubr.bf16.gmra.mrb[0].mxu0 %v235
  %v409 = vpop.f32.mrb[0].mxu0
  %v410 = vadd.f32 0.0, %v409
  %v411 = vpop.f32.mrb[0].mxu0
  %v412 = vpop.f32.mrb[0].mxu0
  %v413 = vadd.f32 0.0, %v412
  %v414 = vpop.f32.mrb[0].mxu0
  %415 = vmatprep.mubr.bf16.mxu0 0
  %416 = vmatmul.mubr.bf16.gmra.mrb[0].mxu0 %v236
  %v417 = vpop.f32.mrb[0].mxu0
  %v418 = vadd.f32 0.0, %v417
  %v419 = vpop.f32.mrb[0].mxu0
  %v420 = vpop.f32.mrb[0].mxu0
  %v421 = vadd.f32 0.0, %v420
  %v422 = vpop.f32.mrb[0].mxu0
  %423 = vmatprep.mubr.bf16.mxu0 0
  %424 = vmatmul.mubr.bf16.gmra.mrb[0].mxu0 %v237
  %v425 = vpop.f32.mrb[0].mxu0
  %v426 = vadd.f32 0.0, %v425
  %v427 = vpop.f32.mrb[0].mxu0
  %v428 = vpop.f32.mrb[0].mxu0
  %v429 = vadd.f32 0.0, %v428
  %v430 = vpop.f32.mrb[0].mxu0
  %431 = vmatprep.mubr.bf16.mxu0 0
  %432 = vmatmul.mubr.bf16.gmra.mrb[0].mxu0 %v238
  %v433 = vpop.f32.mrb[0].mxu0
  %v434 = vadd.f32 0.0, %v433
  %v435 = vpop.f32.mrb[0].mxu0
  %v436 = vpop.f32.mrb[0].mxu0
  %v437 = vadd.f32 0.0, %v436
  %v438 = vpop.f32.mrb[0].mxu0
  %439 = vmatprep.mubr.bf16.mxu0 0
  %440 = vmatmul.mubr.bf16.gmra.mrb[0].mxu0 %v239
  %v441 = vpop.f32.mrb[0].mxu0
  %v442 = vadd.f32 0.0, %v441
  %v443 = vpop.f32.mrb[0].mxu0
  %v444 = vpop.f32.mrb[0].mxu0
  %v445 = vadd.f32 0.0, %v444
  %v446 = vpop.f32.mrb[0].mxu0
  %447 = vmatprep.mubr.bf16.mxu0 0
  %448 = vmatmul.mubr.bf16.gmra.mrb[0].mxu0 %v240
  %v449 = vpop.f32.mrb[0].mxu0
  %v450 = vadd.f32 0.0, %v449
  %v451 = vpop.f32.mrb[0].mxu0
  %v452 = vpop.f32.mrb[0].mxu0
  %v453 = vadd.f32 0.0, %v452
  %v454 = vpop.f32.mrb[0].mxu0
  %455 = vmatprep.mubr.bf16.mxu0 0
  %456 = vmatmul.mubr.bf16.gmra.mrb[0].mxu0 %v241
  %v457 = vpop.f32.mrb[0].mxu0
  %v458 = vadd.f32 0.0, %v457
  %v459 = vpop.f32.mrb[0].mxu0
  %v460 = vpop.f32.mrb[0].mxu0
  %v461 = vadd.f32 0.0, %v460
  %v462 = vpop.f32.mrb[0].mxu0
  %463 = vmatprep.mubr.bf16.mxu0 0
  %464 = vmatmul.mubr.bf16.gmra.mrb[0].mxu0 %v242
  %v465 = vpop.f32.mrb[0].mxu0
  %v466 = vadd.f32 0.0, %v465
  %v467 = vpop.f32.mrb[0].mxu0
  %v468 = vpop.f32.mrb[0].mxu0
  %v469 = vadd.f32 0.0, %v468
  %v470 = vpop.f32.mrb[0].mxu0
  %471 = vmatprep.mubr.bf16.mxu0 0
  %472 = vmatmul.mubr.bf16.gmra.mrb[0].mxu0 %v243
  %v473 = vpop.f32.mrb[0].mxu0
  %v474 = vadd.f32 0.0, %v473
  %v475 = vpop.f32.mrb[0].mxu0
  %v476 = vpop.f32.mrb[0].mxu0
  %v477 = vadd.f32 0.0, %v476
  %v478 = vpop.f32.mrb[0].mxu0
  %479 = vmatprep.mubr.bf16.mxu0 0
  %480 = vmatmul.mubr.bf16.gmra.mrb[0].mxu0 %v244
  %v481 = vpop.f32.mrb[0].mxu0
  %v482 = vadd.f32 0.0, %v481
  %v483 = vpop.f32.mrb[0].mxu0
  %v484 = vpop.f32.mrb[0].mxu0
  %v485 = vadd.f32 0.0, %v484
  %v486 = vpop.f32.mrb[0].mxu0
  %487 = vmatprep.mubr.bf16.mxu0 0
  %488 = vmatmul.mubr.bf16.gmra.mrb[0].mxu0 %v245
  %v489 = vpop.f32.mrb[0].mxu0
  %v490 = vadd.f32 0.0, %v489
  %v491 = vpop.f32.mrb[0].mxu0
  %v492 = vpop.f32.mrb[0].mxu0
  %v493 = vadd.f32 0.0, %v492
  %v494 = vpop.f32.mrb[0].mxu0
  %495 = vmatprep.mubr.bf16.mxu0 0
  %496 = vmatmul.mubr.bf16.gmra.mrb[0].mxu0 %v246
  %v497 = vpop.f32.mrb[0].mxu0
  %v498 = vadd.f32 0.0, %v497
  %v499 = vpop.f32.mrb[0].mxu0
  %v500 = vpop.f32.mrb[0].mxu0
  %v501 = vadd.f32 0.0, %v500
  %v502 = vpop.f32.mrb[0].mxu0
  %503 = vmatprep.mubr.bf16.mxu0 0
  %504 = vmatmul.mubr.bf16.gmra.mrb[0].mxu0 %v247
  %v505 = vpop.f32.mrb[0].mxu0
  %v506 = vadd.f32 0.0, %v505
  %v507 = vpop.f32.mrb[0].mxu0
  %v508 = vpop.f32.mrb[0].mxu0
  %v509 = vadd.f32 0.0, %v508
  %v510 = vpop.f32.mrb[0].mxu0
  %511 = vmatprep.mubr.bf16.mxu0 0
  %512 = vmatmul.mubr.bf16.gmra.mrb[0].mxu0 %v248
  %v513 = vpop.f32.mrb[0].mxu0
  %v514 = vadd.f32 0.0, %v513
  %v515 = vpop.f32.mrb[0].mxu0
  %v516 = vpop.f32.mrb[0].mxu0
  %v517 = vadd.f32 0.0, %v516
  %v518 = vpop.f32.mrb[0].mxu0
  %519 = vmatprep.mubr.bf16.mxu0 0
  %520 = vmatmul.mubr.bf16.gmra.mrb[0].mxu0 %v249
  %v521 = vpop.f32.mrb[0].mxu0
  %v522 = vadd.f32 0.0, %v521
  %v523 = vpop.f32.mrb[0].mxu0
  %v524 = vpop.f32.mrb[0].mxu0
  %v525 = vadd.f32 0.0, %v524
  %v526 = vpop.f32.mrb[0].mxu0
  %527 = vmatprep.mubr.bf16.mxu0 0
  %528 = vmatmul.mubr.bf16.gmra.mrb[0].mxu0 %v250
  %v529 = vpop.f32.mrb[0].mxu0
  %v530 = vadd.f32 0.0, %v529
  %v531 = vpop.f32.mrb[0].mxu0
  %v532 = vpop.f32.mrb[0].mxu0
  %v533 = vadd.f32 0.0, %v532
  %v534 = vpop.f32.mrb[0].mxu0
  %535 = vmatprep.mubr.bf16.mxu0 0
  %536 = vmatmul.mubr.bf16.gmra.mrb[0].mxu0 %v251
  %v537 = vpop.f32.mrb[0].mxu0
  %v538 = vadd.f32 0.0, %v537
  %v539 = vpop.f32.mrb[0].mxu0
  %v540 = vpop.f32.mrb[0].mxu0
  %v541 = vadd.f32 0.0, %v540
  %v542 = vpop.f32.mrb[0].mxu0
  %543 = vmatprep.mubr.bf16.mxu0 0
  %544 = vmatmul.mubr.bf16.gmra.mrb[0].mxu0 %v252
  %v545 = vpop.f32.mrb[0].mxu0
  %v546 = vadd.f32 0.0, %v545
  %v547 = vpop.f32.mrb[0].mxu0
  %v548 = vpop.f32.mrb[0].mxu0
  %v549 = vadd.f32 0.0, %v548
  %v550 = vpop.f32.mrb[0].mxu0
  %551 = vmatprep.mubr.bf16.mxu0 0
  %552 = vmatmul.mubr.bf16.gmra.mrb[0].mxu0 %v253
  %v553 = vpop.f32.mrb[0].mxu0
  %v554 = vadd.f32 0.0, %v553
  %v555 = vpop.f32.mrb[0].mxu0
  %v556 = vpop.f32.mrb[0].mxu0
  %v557 = vadd.f32 0.0, %v556
  %v558 = vpop.f32.mrb[0].mxu0
  %559 = vmatprep.mubr.bf16.mxu0 0
  %560 = vmatmul.mubr.bf16.gmra.mrb[0].mxu0 %v254
  %v561 = vpop.f32.mrb[0].mxu0
  %v562 = vadd.f32 0.0, %v561
  %v563 = vpop.f32.mrb[0].mxu0
  %v564 = vpop.f32.mrb[0].mxu0
  %v565 = vadd.f32 0.0, %v564
  %v566 = vpop.f32.mrb[0].mxu0
  %567 = vmatprep.mubr.bf16.mxu0 0
  %568 = vmatmul.mubr.bf16.gmra.mrb[0].mxu0 %v255
  %v569 = vpop.f32.mrb[0].mxu0
  %v570 = vadd.f32 0.0, %v569
  %v571 = vpop.f32.mrb[0].mxu0
  %v572 = vpop.f32.mrb[0].mxu0
  %v573 = vadd.f32 0.0, %v572
  %v574 = vpop.f32.mrb[0].mxu0
  %575 = vmatprep.mubr.bf16.mxu0 0
  %576 = vmatmul.mubr.bf16.gmra.mrb[0].mxu0 %v256
  %v577 = vpop.f32.mrb[0].mxu0
  %v578 = vadd.f32 0.0, %v577
  %v579 = vpop.f32.mrb[0].mxu0
  %v580 = vpop.f32.mrb[0].mxu0
  %v581 = vadd.f32 0.0, %v580
  %v582 = vpop.f32.mrb[0].mxu0
  %583 = vmatprep.mubr.bf16.mxu0 0
  %584 = vmatmul.mubr.bf16.gmra.mrb[0].mxu0 %v257
  %v585 = vpop.f32.mrb[0].mxu0
  %v586 = vadd.f32 0.0, %v585
  %v587 = vpop.f32.mrb[0].mxu0
  %v588 = vpop.f32.mrb[0].mxu0
  %v589 = vadd.f32 0.0, %v588
  %v590 = vpop.f32.mrb[0].mxu0
  %591 = vmatprep.mubr.bf16.mxu0 0
  %592 = vmatmul.mubr.bf16.gmra.mrb[0].mxu0 %v258
  %v593 = vpop.f32.mrb[0].mxu0
  %v594 = vadd.f32 0.0, %v593
  %v595 = vpop.f32.mrb[0].mxu0
  %v596 = vpop.f32.mrb[0].mxu0
  %v597 = vadd.f32 0.0, %v596
  %v598 = vpop.f32.mrb[0].mxu0
  %599 = vmatprep.mubr.bf16.mxu0 0
  %600 = vmatmul.mubr.bf16.gmra.mrb[0].mxu0 %v259
  %v601 = vpop.f32.mrb[0].mxu0
  %v602 = vadd.f32 0.0, %v601
  %v603 = vpop.f32.mrb[0].mxu0
  %v604 = vpop.f32.mrb[0].mxu0
  %v605 = vadd.f32 0.0, %v604
  %v606 = vpop.f32.mrb[0].mxu0
  %607 = vmatprep.mubr.bf16.mxu0 0
  %608 = vmatmul.mubr.bf16.gmra.mrb[0].mxu0 %v260
  %v609 = vpop.f32.mrb[0].mxu0
  %v610 = vadd.f32 0.0, %v609
  %v611 = vpop.f32.mrb[0].mxu0
  %v612 = vpop.f32.mrb[0].mxu0
  %v613 = vadd.f32 0.0, %v612
  %v614 = vpop.f32.mrb[0].mxu0
  %615 = vmatprep.mubr.bf16.mxu0 0
  %616 = vmatmul.mubr.bf16.gmra.mrb[0].mxu0 %v261
  %v617 = vpop.f32.mrb[0].mxu0
  %v618 = vadd.f32 0.0, %v617
  %v619 = vpop.f32.mrb[0].mxu0
  %v620 = vpop.f32.mrb[0].mxu0
  %v621 = vadd.f32 0.0, %v620
  %v622 = vpop.f32.mrb[0].mxu0
  %623 = vmatprep.mubr.bf16.mxu0 0
  %624 = vmatmul.mubr.bf16.gmra.mrb[0].mxu0 %v262
  %v625 = vpop.f32.mrb[0].mxu0
  %v626 = vadd.f32 0.0, %v625
  %v627 = vpop.f32.mrb[0].mxu0
  %v628 = vpop.f32.mrb[0].mxu0
  %v629 = vadd.f32 0.0, %v628
  %v630 = vpop.f32.mrb[0].mxu0
  %631 = vdwg.mxu0
  %v632 = vld [vmem:[#allocation2] sm:$0x3]
  %v633 = vadd.f32 %v378, %v381
  %v634 = vadd.f32 %v633, %v386
  %v635 = vadd.f32 %v634, %v389
  %v636 = vadd.f32 %v635, %v394
  %v637 = vadd.f32 %v636, %v397
  %v638 = vadd.f32 %v637, %v402
  %v639 = vadd.f32 %v638, %v405
  %v640 = vadd.f32 %v639, %v410
  %v641 = vadd.f32 %v640, %v413
  %v642 = vadd.f32 %v641, %v418
  %v643 = vadd.f32 %v642, %v421
  %v644 = vadd.f32 %v643, %v426
  %v645 = vadd.f32 %v644, %v429
  %v646 = vadd.f32 %v645, %v434
  %v647 = vadd.f32 %v646, %v437
  %v648 = vadd.f32 %v647, %v442
  %v649 = vadd.f32 %v648, %v445
  %v650 = vadd.f32 %v649, %v450
  %v651 = vadd.f32 %v650, %v453
  %v652 = vadd.f32 %v651, %v458
  %v653 = vadd.f32 %v652, %v461
  %v654 = vadd.f32 %v653, %v466
  %v655 = vadd.f32 %v654, %v469
  %v656 = vadd.f32 %v655, %v474
  %v657 = vadd.f32 %v656, %v477
  %v658 = vadd.f32 %v657, %v482
  %v659 = vadd.f32 %v658, %v485
  %v660 = vadd.f32 %v659, %v490
  %v661 = vadd.f32 %v660, %v493
  %v662 = vadd.f32 %v661, %v498
  %v663 = vadd.f32 %v662, %v501
  %v664 = vadd.f32 %v663, %v506
  %v665 = vadd.f32 %v664, %v509
  %v666 = vadd.f32 %v665, %v514
  %v667 = vadd.f32 %v666, %v517
  %v668 = vadd.f32 %v667, %v522
  %v669 = vadd.f32 %v668, %v525
  %v670 = vadd.f32 %v669, %v530
  %v671 = vadd.f32 %v670, %v533
  %v672 = vadd.f32 %v671, %v538
  %v673 = vadd.f32 %v672, %v541
  %v674 = vadd.f32 %v673, %v546
  %v675 = vadd.f32 %v674, %v549
  %v676 = vadd.f32 %v675, %v554
  %v677 = vadd.f32 %v676, %v557
  %v678 = vadd.f32 %v677, %v562
  %v679 = vadd.f32 %v678, %v565
  %v680 = vadd.f32 %v679, %v570
  %v681 = vadd.f32 %v680, %v573
  %v682 = vadd.f32 %v681, %v578
  %v683 = vadd.f32 %v682, %v581
  %v684 = vadd.f32 %v683, %v586
  %v685 = vadd.f32 %v684, %v589
  %v686 = vadd.f32 %v685, %v594
  %v687 = vadd.f32 %v686, %v597
  %v688 = vadd.f32 %v687, %v602
  %v689 = vadd.f32 %v688, %v605
  %v690 = vadd.f32 %v689, %v610
  %v691 = vadd.f32 %v690, %v613
  %v692 = vadd.f32 %v691, %v618
  %v693 = vadd.f32 %v692, %v621
  %v694 = vadd.f32 %v693, %v626
  %v695 = vadd.f32 %v694, %v629
  %v696 = vrot.slane %v695, 4
  %v697 = vadd.f32 %v695, %v696
  %v698 = vrot.slane %v697, 2
  %v699 = vadd.f32 %v697, %v698
  %v700 = vrot.slane %v699, 1
  %v701 = vadd.f32 %v699, %v700
  %v702 = vmul.f32 %v378, %v378
  %v703 = vmul.f32 %v381, %v381
  %v704 = vmul.f32 %v386, %v386
  %v705 = vmul.f32 %v389, %v389
  %v706 = vmul.f32 %v394, %v394
  %v707 = vmul.f32 %v397, %v397
  %v708 = vmul.f32 %v402, %v402
  %v709 = vmul.f32 %v405, %v405
  %v710 = vmul.f32 %v410, %v410
  %v711 = vmul.f32 %v413, %v413
  %v712 = vmul.f32 %v418, %v418
  %v713 = vmul.f32 %v421, %v421
  %v714 = vmul.f32 %v426, %v426
  %v715 = vmul.f32 %v429, %v429
  %v716 = vmul.f32 %v434, %v434
  %v717 = vmul.f32 %v437, %v437
  %v718 = vmul.f32 %v442, %v442
  %v719 = vmul.f32 %v445, %v445
  %v720 = vmul.f32 %v450, %v450
  %v721 = vmul.f32 %v453, %v453
  %v722 = vmul.f32 %v458, %v458
  %v723 = vmul.f32 %v461, %v461
  %v724 = vmul.f32 %v466, %v466
  %v725 = vmul.f32 %v469, %v469
  %v726 = vmul.f32 %v474, %v474
  %v727 = vmul.f32 %v477, %v477
  %v728 = vmul.f32 %v482, %v482
  %v729 = vmul.f32 %v485, %v485
  %v730 = vmul.f32 %v490, %v490
  %v731 = vmul.f32 %v493, %v493
  %v732 = vmul.f32 %v498, %v498
  %v733 = vmul.f32 %v501, %v501
  %v734 = vmul.f32 %v506, %v506
  %v735 = vmul.f32 %v509, %v509
  %v736 = vmul.f32 %v514, %v514
  %v737 = vmul.f32 %v517, %v517
  %v738 = vmul.f32 %v522, %v522
  %v739 = vmul.f32 %v525, %v525
  %v740 = vmul.f32 %v530, %v530
  %v741 = vmul.f32 %v533, %v533
  %v742 = vmul.f32 %v538, %v538
  %v743 = vmul.f32 %v541, %v541
  %v744 = vmul.f32 %v546, %v546
  %v745 = vmul.f32 %v549, %v549
  %v746 = vmul.f32 %v554, %v554
  %v747 = vmul.f32 %v557, %v557
  %v748 = vmul.f32 %v562, %v562
  %v749 = vmul.f32 %v565, %v565
  %v750 = vmul.f32 %v570, %v570
  %v751 = vmul.f32 %v573, %v573
  %v752 = vmul.f32 %v578, %v578
  %v753 = vmul.f32 %v581, %v581
  %v754 = vmul.f32 %v586, %v586
  %v755 = vmul.f32 %v589, %v589
  %v756 = vmul.f32 %v594, %v594
  %v757 = vmul.f32 %v597, %v597
  %v758 = vmul.f32 %v602, %v602
  %v759 = vmul.f32 %v605, %v605
  %v760 = vmul.f32 %v610, %v610
  %v761 = vmul.f32 %v613, %v613
  %v762 = vmul.f32 %v618, %v618
  %v763 = vmul.f32 %v621, %v621
  %v764 = vmul.f32 %v626, %v626
  %v765 = vmul.f32 %v629, %v629
  %v766 = vadd.f32 %v702, %v703
  %v767 = vadd.f32 %v766, %v704
  %v768 = vadd.f32 %v767, %v705
  %v769 = vadd.f32 %v768, %v706
  %v770 = vadd.f32 %v769, %v707
  %v771 = vadd.f32 %v770, %v708
  %v772 = vadd.f32 %v771, %v709
  %v773 = vadd.f32 %v772, %v710
  %v774 = vadd.f32 %v773, %v711
  %v775 = vadd.f32 %v774, %v712
  %v776 = vadd.f32 %v775, %v713
  %v777 = vadd.f32 %v776, %v714
  %v778 = vadd.f32 %v777, %v715
  %v779 = vadd.f32 %v778, %v716
  %v780 = vadd.f32 %v779, %v717
  %v781 = vadd.f32 %v780, %v718
  %v782 = vadd.f32 %v781, %v719
  %v783 = vadd.f32 %v782, %v720
  %v784 = vadd.f32 %v783, %v721
  %v785 = vadd.f32 %v784, %v722
  %v786 = vadd.f32 %v785, %v723
  %v787 = vadd.f32 %v786, %v724
  %v788 = vadd.f32 %v787, %v725
  %v789 = vadd.f32 %v788, %v726
  %v790 = vadd.f32 %v789, %v727
  %v791 = vadd.f32 %v790, %v728
  %v792 = vadd.f32 %v791, %v729
  %v793 = vadd.f32 %v792, %v730
  %v794 = vadd.f32 %v793, %v731
  %v795 = vadd.f32 %v794, %v732
  %v796 = vadd.f32 %v795, %v733
  %v797 = vadd.f32 %v796, %v734
  %v798 = vadd.f32 %v797, %v735
  %v799 = vadd.f32 %v798, %v736
  %v800 = vadd.f32 %v799, %v737
  %v801 = vadd.f32 %v800, %v738
  %v802 = vadd.f32 %v801, %v739
  %v803 = vadd.f32 %v802, %v740
  %v804 = vadd.f32 %v803, %v741
  %v805 = vadd.f32 %v804, %v742
  %v806 = vadd.f32 %v805, %v743
  %v807 = vadd.f32 %v806, %v744
  %v808 = vadd.f32 %v807, %v745
  %v809 = vadd.f32 %v808, %v746
  %v810 = vadd.f32 %v809, %v747
  %v811 = vadd.f32 %v810, %v748
  %v812 = vadd.f32 %v811, %v749
  %v813 = vadd.f32 %v812, %v750
  %v814 = vadd.f32 %v813, %v751
  %v815 = vadd.f32 %v814, %v752
  %v816 = vadd.f32 %v815, %v753
  %v817 = vadd.f32 %v816, %v754
  %v818 = vadd.f32 %v817, %v755
  %v819 = vadd.f32 %v818, %v756
  %v820 = vadd.f32 %v819, %v757
  %v821 = vadd.f32 %v820, %v758
  %v822 = vadd.f32 %v821, %v759
  %v823 = vadd.f32 %v822, %v760
  %v824 = vadd.f32 %v823, %v761
  %v825 = vadd.f32 %v824, %v762
  %v826 = vadd.f32 %v825, %v763
  %v827 = vadd.f32 %v826, %v764
  %v828 = vadd.f32 %v827, %v765
  %v829 = vrot.slane %v828, 4
  %v830 = vadd.f32 %v828, %v829
  %v831 = vrot.slane %v830, 2
  %v832 = vadd.f32 %v830, %v831
  %v833 = vrot.slane %v832, 1
  %v834 = vadd.f32 %v832, %v833
  %vm835 = vcmask 1040384
  %v836 = vsel %vm835, %v701, %v834
  %v837 = vadd.f32 %v632, %v836
  %838 = vst [vmem:[#allocation2] sm:$0x3] %v837
  %s839 = smul.u32 0, 512
  %v840 = vpack.c.bf16 %v381, %v378
  %v841 = vpack.c.bf16 %v389, %v386
  %v842 = vpack.c.bf16 %v397, %v394
  %v843 = vpack.c.bf16 %v405, %v402
  %v844 = vpack.c.bf16 %v413, %v410
  %v845 = vpack.c.bf16 %v421, %v418
  %v846 = vpack.c.bf16 %v429, %v426
  %v847 = vpack.c.bf16 %v437, %v434
  %v848 = vpack.c.bf16 %v445, %v442
  %v849 = vpack.c.bf16 %v453, %v450
  %v850 = vpack.c.bf16 %v461, %v458
  %v851 = vpack.c.bf16 %v469, %v466
  %v852 = vpack.c.bf16 %v477, %v474
  %v853 = vpack.c.bf16 %v485, %v482
  %v854 = vpack.c.bf16 %v493, %v490
  %v855 = vpack.c.bf16 %v501, %v498
  %v856 = vpack.c.bf16 %v509, %v506
  %v857 = vpack.c.bf16 %v517, %v514
  %v858 = vpack.c.bf16 %v525, %v522
  %v859 = vpack.c.bf16 %v533, %v530
  %v860 = vpack.c.bf16 %v541, %v538
  %v861 = vpack.c.bf16 %v549, %v546
  %v862 = vpack.c.bf16 %v557, %v554
  %v863 = vpack.c.bf16 %v565, %v562
  %v864 = vpack.c.bf16 %v573, %v570
  %v865 = vpack.c.bf16 %v581, %v578
  %v866 = vpack.c.bf16 %v589, %v586
  %v867 = vpack.c.bf16 %v597, %v594
  %v868 = vpack.c.bf16 %v605, %v602
  %v869 = vpack.c.bf16 %v613, %v610
  %v870 = vpack.c.bf16 %v621, %v618
  %v871 = vpack.c.bf16 %v629, %v626
  %v904 = vunpack.c.l.b16 %v840
  %v905 = vunpack.c.h.b16 %v840
  %v906 = vunpack.c.l.b16 %v841
  %v907 = vunpack.c.h.b16 %v841
  %v908 = vunpack.c.l.b16 %v842
  %v909 = vunpack.c.h.b16 %v842
  %v910 = vunpack.c.l.b16 %v843
  %v911 = vunpack.c.h.b16 %v843
  %v912 = vunpack.c.l.b16 %v844
  %v913 = vunpack.c.h.b16 %v844
  %v914 = vunpack.c.l.b16 %v845
  %v915 = vunpack.c.h.b16 %v845
  %v916 = vunpack.c.l.b16 %v846
  %v917 = vunpack.c.h.b16 %v846
  %v918 = vunpack.c.l.b16 %v847
  %v919 = vunpack.c.h.b16 %v847
  %v920 = vunpack.c.l.b16 %v848
  %v921 = vunpack.c.h.b16 %v848
  %v922 = vunpack.c.l.b16 %v849
  %v923 = vunpack.c.h.b16 %v849
  %v924 = vunpack.c.l.b16 %v850
  %v925 = vunpack.c.h.b16 %v850
  %v926 = vunpack.c.l.b16 %v851
  %v927 = vunpack.c.h.b16 %v851
  %v928 = vunpack.c.l.b16 %v852
  %v929 = vunpack.c.h.b16 %v852
  %v930 = vunpack.c.l.b16 %v853
  %v931 = vunpack.c.h.b16 %v853
  %v932 = vunpack.c.l.b16 %v854
  %v933 = vunpack.c.h.b16 %v854
  %v934 = vunpack.c.l.b16 %v855
  %v935 = vunpack.c.h.b16 %v855
  %v936 = vunpack.c.l.b16 %v856
  %v937 = vunpack.c.h.b16 %v856
  %v938 = vunpack.c.l.b16 %v857
  %v939 = vunpack.c.h.b16 %v857
  %v940 = vunpack.c.l.b16 %v858
  %v941 = vunpack.c.h.b16 %v858
  %v942 = vunpack.c.l.b16 %v859
  %v943 = vunpack.c.h.b16 %v859
  %v944 = vunpack.c.l.b16 %v860
  %v945 = vunpack.c.h.b16 %v860
  %v946 = vunpack.c.l.b16 %v861
  %v947 = vunpack.c.h.b16 %v861
  %v948 = vunpack.c.l.b16 %v862
  %v949 = vunpack.c.h.b16 %v862
  %v950 = vunpack.c.l.b16 %v863
  %v951 = vunpack.c.h.b16 %v863
  %v952 = vunpack.c.l.b16 %v864
  %v953 = vunpack.c.h.b16 %v864
  %v954 = vunpack.c.l.b16 %v865
  %v955 = vunpack.c.h.b16 %v865
  %v956 = vunpack.c.l.b16 %v866
  %v957 = vunpack.c.h.b16 %v866
  %v958 = vunpack.c.l.b16 %v867
  %v959 = vunpack.c.h.b16 %v867
  %v960 = vunpack.c.l.b16 %v868
  %v961 = vunpack.c.h.b16 %v868
  %v962 = vunpack.c.l.b16 %v869
  %v963 = vunpack.c.h.b16 %v869
  %v964 = vunpack.c.l.b16 %v870
  %v965 = vunpack.c.h.b16 %v870
  %v966 = vunpack.c.l.b16 %v871
  %v967 = vunpack.c.h.b16 %v871
  %v968 = vpack.c.b16 %v904, %v904
  %v969 = vpack.c.b16 %v905, %v905
  %v970 = vpack.c.b16 %v906, %v906
  %v971 = vpack.c.b16 %v907, %v907
  %v972 = vpack.c.b16 %v908, %v908
  %v973 = vpack.c.b16 %v909, %v909
  %v974 = vpack.c.b16 %v910, %v910
  %v975 = vpack.c.b16 %v911, %v911
  %v976 = vpack.c.b16 %v912, %v912
  %v977 = vpack.c.b16 %v913, %v913
  %v978 = vpack.c.b16 %v914, %v914
  %v979 = vpack.c.b16 %v915, %v915
  %v980 = vpack.c.b16 %v916, %v916
  %v981 = vpack.c.b16 %v917, %v917
  %v982 = vpack.c.b16 %v918, %v918
  %v983 = vpack.c.b16 %v919, %v919
  %v984 = vpack.c.b16 %v920, %v920
  %v985 = vpack.c.b16 %v921, %v921
  %v986 = vpack.c.b16 %v922, %v922
  %v987 = vpack.c.b16 %v923, %v923
  %v988 = vpack.c.b16 %v924, %v924
  %v989 = vpack.c.b16 %v925, %v925
  %v990 = vpack.c.b16 %v926, %v926
  %v991 = vpack.c.b16 %v927, %v927
  %v992 = vpack.c.b16 %v928, %v928
  %v993 = vpack.c.b16 %v929, %v929
  %v994 = vpack.c.b16 %v930, %v930
  %v995 = vpack.c.b16 %v931, %v931
  %v996 = vpack.c.b16 %v932, %v932
  %v997 = vpack.c.b16 %v933, %v933
  %v998 = vpack.c.b16 %v934, %v934
  %v999 = vpack.c.b16 %v935, %v935
  %v1000 = vpack.c.b16 %v936, %v936
  %v1001 = vpack.c.b16 %v937, %v937
  %v1002 = vpack.c.b16 %v938, %v938
  %v1003 = vpack.c.b16 %v939, %v939
  %v1004 = vpack.c.b16 %v940, %v940
  %v1005 = vpack.c.b16 %v941, %v941
  %v1006 = vpack.c.b16 %v942, %v942
  %v1007 = vpack.c.b16 %v943, %v943
  %v1008 = vpack.c.b16 %v944, %v944
  %v1009 = vpack.c.b16 %v945, %v945
  %v1010 = vpack.c.b16 %v946, %v946
  %v1011 = vpack.c.b16 %v947, %v947
  %v1012 = vpack.c.b16 %v948, %v948
  %v1013 = vpack.c.b16 %v949, %v949
  %v1014 = vpack.c.b16 %v950, %v950
  %v1015 = vpack.c.b16 %v951, %v951
  %v1016 = vpack.c.b16 %v952, %v952
  %v1017 = vpack.c.b16 %v953, %v953
  %v1018 = vpack.c.b16 %v954, %v954
  %v1019 = vpack.c.b16 %v955, %v955
  %v1020 = vpack.c.b16 %v956, %v956
  %v1021 = vpack.c.b16 %v957, %v957
  %v1022 = vpack.c.b16 %v958, %v958
  %v1023 = vpack.c.b16 %v959, %v959
  %v1024 = vpack.c.b16 %v960, %v960
  %v1025 = vpack.c.b16 %v961, %v961
  %v1026 = vpack.c.b16 %v962, %v962
  %v1027 = vpack.c.b16 %v963, %v963
  %v1028 = vpack.c.b16 %v964, %v964
  %v1029 = vpack.c.b16 %v965, %v965
  %v1030 = vpack.c.b16 %v966, %v966
  %v1031 = vpack.c.b16 %v967, %v967
  %s1096 = sshra.s32 %s839, 3
  %s1097 = sand.u32 %s839, 7
  %s1098 = smul.addr %s1096, 4
  %s1099 = scalar_lea.vmem %s4, %s1098
  %1100 = vst [vmem:[%s1099] sm:$0xf] %v968
  %1101 = vst [vmem:[%s1099 + $0x4] sm:$0xf] %v969
  %1102 = vst [vmem:[%s1099 + $0x8] sm:$0xf] %v970
  %1103 = vst [vmem:[%s1099 + $0xc] sm:$0xf] %v971
  %1104 = vst [vmem:[%s1099 + $0x10] sm:$0xf] %v972
  %1105 = vst [vmem:[%s1099 + $0x14] sm:$0xf] %v973
  %1106 = vst [vmem:[%s1099 + $0x18] sm:$0xf] %v974
  %1107 = vst [vmem:[%s1099 + $0x1c] sm:$0xf] %v975
  %1108 = vst [vmem:[%s1099 + $0x20] sm:$0xf] %v976
  %1109 = vst [vmem:[%s1099 + $0x24] sm:$0xf] %v977
  %1110 = vst [vmem:[%s1099 + $0x28] sm:$0xf] %v978
  %1111 = vst [vmem:[%s1099 + $0x2c] sm:$0xf] %v979
  %1112 = vst [vmem:[%s1099 + $0x30] sm:$0xf] %v980
  %1113 = vst [vmem:[%s1099 + $0x34] sm:$0xf] %v981
  %1114 = vst [vmem:[%s1099 + $0x38] sm:$0xf] %v982
  %1115 = vst [vmem:[%s1099 + $0x3c] sm:$0xf] %v983
  %1116 = vst [vmem:[%s1099 + $0x40] sm:$0xf] %v984
  %1117 = vst [vmem:[%s1099 + $0x44] sm:$0xf] %v985
  %1118 = vst [vmem:[%s1099 + $0x48] sm:$0xf] %v986
  %1119 = vst [vmem:[%s1099 + $0x4c] sm:$0xf] %v987
  %1120 = vst [vmem:[%s1099 + $0x50] sm:$0xf] %v988
  %1121 = vst [vmem:[%s1099 + $0x54] sm:$0xf] %v989
  %1122 = vst [vmem:[%s1099 + $0x58] sm:$0xf] %v990
  %1123 = vst [vmem:[%s1099 + $0x5c] sm:$0xf] %v991
  %1124 = vst [vmem:[%s1099 + $0x60] sm:$0xf] %v992
  %1125 = vst [vmem:[%s1099 + $0x64] sm:$0xf] %v993
  %1126 = vst [vmem:[%s1099 + $0x68] sm:$0xf] %v994
  %1127 = vst [vmem:[%s1099 + $0x6c] sm:$0xf] %v995
  %1128 = vst [vmem:[%s1099 + $0x70] sm:$0xf] %v996
  %1129 = vst [vmem:[%s1099 + $0x74] sm:$0xf] %v997
  %1130 = vst [vmem:[%s1099 + $0x78] sm:$0xf] %v998
  %1131 = vst [vmem:[%s1099 + $0x7c] sm:$0xf] %v999
  %1132 = vst [vmem:[%s1099 + $0x80] sm:$0xf] %v1000
  %1133 = vst [vmem:[%s1099 + $0x84] sm:$0xf] %v1001
  %1134 = vst [vmem:[%s1099 + $0x88] sm:$0xf] %v1002
  %1135 = vst [vmem:[%s1099 + $0x8c] sm:$0xf] %v1003
  %1136 = vst [vmem:[%s1099 + $0x90] sm:$0xf] %v1004
  %1137 = vst [vmem:[%s1099 + $0x94] sm:$0xf] %v1005
  %1138 = vst [vmem:[%s1099 + $0x98] sm:$0xf] %v1006
  %1139 = vst [vmem:[%s1099 + $0x9c] sm:$0xf] %v1007
  %1140 = vst [vmem:[%s1099 + $0xa0] sm:$0xf] %v1008
  %1141 = vst [vmem:[%s1099 + $0xa4] sm:$0xf] %v1009
  %1142 = vst [vmem:[%s1099 + $0xa8] sm:$0xf] %v1010
  %1143 = vst [vmem:[%s1099 + $0xac] sm:$0xf] %v1011
  %1144 = vst [vmem:[%s1099 + $0xb0] sm:$0xf] %v1012
  %1145 = vst [vmem:[%s1099 + $0xb4] sm:$0xf] %v1013
  %1146 = vst [vmem:[%s1099 + $0xb8] sm:$0xf] %v1014
  %1147 = vst [vmem:[%s1099 + $0xbc] sm:$0xf] %v1015
  %1148 = vst [vmem:[%s1099 + $0xc0] sm:$0xf] %v1016
  %1149 = vst [vmem:[%s1099 + $0xc4] sm:$0xf] %v1017
  %1150 = vst [vmem:[%s1099 + $0xc8] sm:$0xf] %v1018
  %1151 = vst [vmem:[%s1099 + $0xcc] sm:$0xf] %v1019
  %1152 = vst [vmem:[%s1099 + $0xd0] sm:$0xf] %v1020
  %1153 = vst [vmem:[%s1099 + $0xd4] sm:$0xf] %v1021
  %1154 = vst [vmem:[%s1099 + $0xd8] sm:$0xf] %v1022
  %1155 = vst [vmem:[%s1099 + $0xdc] sm:$0xf] %v1023
  %1156 = vst [vmem:[%s1099 + $0xe0] sm:$0xf] %v1024
  %1157 = vst [vmem:[%s1099 + $0xe4] sm:$0xf] %v1025
  %1158 = vst [vmem:[%s1099 + $0xe8] sm:$0xf] %v1026
  %1159 = vst [vmem:[%s1099 + $0xec] sm:$0xf] %v1027
  %1160 = vst [vmem:[%s1099 + $0xf0] sm:$0xf] %v1028
  %1161 = vst [vmem:[%s1099 + $0xf4] sm:$0xf] %v1029
  %1162 = vst [vmem:[%s1099 + $0xf8] sm:$0xf] %v1030
  %1163 = vst [vmem:[%s1099 + $0xfc] sm:$0xf] %v1031
  // Predicated region
  $region22: #{double_conv.2} parent=0 // pred_check
    %p1164 = pneg %p18
  $region23: #{double_conv.2} parent=0 // pred_check_branch
    %1166 = sbr.rel (%p1164) target = $region25
  $region24: #{double_conv.2} parent=0 // pred_region
    %v1167 = vld [vmem:[#allocation2] sm:$0x1]
    %v1168 = vmul.f32 %v1167, 0.001953125
    %v1169 = vld [vmem:[#allocation2 + $0x1] sm:$0x1]
    %v1170 = vmul.f32 %v1169, 0.001953125
    %v1171 = vmul.f32 %v1168, %v1168
    %v1172 = vsub.f32 %v1170, %v1171
    %v1173 = vmax.f32 %v1172, 0.0
    %v1174 = vld [vmem:[%s2] sm:$0x1]
    %v1175 = vadd.f32 %v1173, 1e-05
    %v1176 = vrsqrt.pop %v1175
    %v1177 = vmul.f32 %v1174, %v1176
    %v1178 = vld [vmem:[%s3] sm:$0x1]
    %v1179 = vmul.f32 %v1168, %v1177
    %v1180 = vsub.f32 %v1178, %v1179
    %v1181 = vld [vmem:[%s4] sm:$0xf]
    %v1182 = vld [vmem:[%s4 + $0x4] sm:$0xf]
    %v1183 = vld [vmem:[%s4 + $0x8] sm:$0xf]
    %v1184 = vld [vmem:[%s4 + $0xc] sm:$0xf]
    %v1185 = vld [vmem:[%s4 + $0x10] sm:$0xf]
    %v1186 = vld [vmem:[%s4 + $0x14] sm:$0xf]
    %v1187 = vld [vmem:[%s4 + $0x18] sm:$0xf]
    %v1188 = vld [vmem:[%s4 + $0x1c] sm:$0xf]
    %v1189 = vld [vmem:[%s4 + $0x20] sm:$0xf]
    %v1190 = vld [vmem:[%s4 + $0x24] sm:$0xf]
    %v1191 = vld [vmem:[%s4 + $0x28] sm:$0xf]
    %v1192 = vld [vmem:[%s4 + $0x2c] sm:$0xf]
    %v1193 = vld [vmem:[%s4 + $0x30] sm:$0xf]
    %v1194 = vld [vmem:[%s4 + $0x34] sm:$0xf]
    %v1195 = vld [vmem:[%s4 + $0x38] sm:$0xf]
    %v1196 = vld [vmem:[%s4 + $0x3c] sm:$0xf]
    %v1197 = vld [vmem:[%s4 + $0x40] sm:$0xf]
    %v1198 = vld [vmem:[%s4 + $0x44] sm:$0xf]
    %v1199 = vld [vmem:[%s4 + $0x48] sm:$0xf]
    %v1200 = vld [vmem:[%s4 + $0x4c] sm:$0xf]
    %v1201 = vld [vmem:[%s4 + $0x50] sm:$0xf]
    %v1202 = vld [vmem:[%s4 + $0x54] sm:$0xf]
    %v1203 = vld [vmem:[%s4 + $0x58] sm:$0xf]
    %v1204 = vld [vmem:[%s4 + $0x5c] sm:$0xf]
    %v1205 = vld [vmem:[%s4 + $0x60] sm:$0xf]
    %v1206 = vld [vmem:[%s4 + $0x64] sm:$0xf]
    %v1207 = vld [vmem:[%s4 + $0x68] sm:$0xf]
    %v1208 = vld [vmem:[%s4 + $0x6c] sm:$0xf]
    %v1209 = vld [vmem:[%s4 + $0x70] sm:$0xf]
    %v1210 = vld [vmem:[%s4 + $0x74] sm:$0xf]
    %v1211 = vld [vmem:[%s4 + $0x78] sm:$0xf]
    %v1212 = vld [vmem:[%s4 + $0x7c] sm:$0xf]
    %v1213 = vld [vmem:[%s4 + $0x80] sm:$0xf]
    %v1214 = vld [vmem:[%s4 + $0x84] sm:$0xf]
    %v1215 = vld [vmem:[%s4 + $0x88] sm:$0xf]
    %v1216 = vld [vmem:[%s4 + $0x8c] sm:$0xf]
    %v1217 = vld [vmem:[%s4 + $0x90] sm:$0xf]
    %v1218 = vld [vmem:[%s4 + $0x94] sm:$0xf]
    %v1219 = vld [vmem:[%s4 + $0x98] sm:$0xf]
    %v1220 = vld [vmem:[%s4 + $0x9c] sm:$0xf]
    %v1221 = vld [vmem:[%s4 + $0xa0] sm:$0xf]
    %v1222 = vld [vmem:[%s4 + $0xa4] sm:$0xf]
    %v1223 = vld [vmem:[%s4 + $0xa8] sm:$0xf]
    %v1224 = vld [vmem:[%s4 + $0xac] sm:$0xf]
    %v1225 = vld [vmem:[%s4 + $0xb0] sm:$0xf]
    %v1226 = vld [vmem:[%s4 + $0xb4] sm:$0xf]
    %v1227 = vld [vmem:[%s4 + $0xb8] sm:$0xf]
    %v1228 = vld [vmem:[%s4 + $0xbc] sm:$0xf]
    %v1229 = vld [vmem:[%s4 + $0xc0] sm:$0xf]
    %v1230 = vld [vmem:[%s4 + $0xc4] sm:$0xf]
    %v1231 = vld [vmem:[%s4 + $0xc8] sm:$0xf]
    %v1232 = vld [vmem:[%s4 + $0xcc] sm:$0xf]
    %v1233 = vld [vmem:[%s4 + $0xd0] sm:$0xf]
    %v1234 = vld [vmem:[%s4 + $0xd4] sm:$0xf]
    %v1235 = vld [vmem:[%s4 + $0xd8] sm:$0xf]
    %v1236 = vld [vmem:[%s4 + $0xdc] sm:$0xf]
    %v1237 = vld [vmem:[%s4 + $0xe0] sm:$0xf]
    %v1238 = vld [vmem:[%s4 + $0xe4] sm:$0xf]
    %v1239 = vld [vmem:[%s4 + $0xe8] sm:$0xf]
    %v1240 = vld [vmem:[%s4 + $0xec] sm:$0xf]
    %v1241 = vld [vmem:[%s4 + $0xf0] sm:$0xf]
    %v1242 = vld [vmem:[%s4 + $0xf4] sm:$0xf]
    %v1243 = vld [vmem:[%s4 + $0xf8] sm:$0xf]
    %v1244 = vld [vmem:[%s4 + $0xfc] sm:$0xf]
    %v1245 = vunpack.c.l.bf16 %v1181
    %v1246 = vunpack.c.l.bf16 %v1182
    %v1247 = vunpack.c.l.bf16 %v1183
    %v1248 = vunpack.c.l.bf16 %v1184
    %v1249 = vunpack.c.l.bf16 %v1185
    %v1250 = vunpack.c.l.bf16 %v1186
    %v1251 = vunpack.c.l.bf16 %v1187
    %v1252 = vunpack.c.l.bf16 %v1188
    %v1253 = vunpack.c.l.bf16 %v1189
    %v1254 = vunpack.c.l.bf16 %v1190
    %v1255 = vunpack.c.l.bf16 %v1191
    %v1256 = vunpack.c.l.bf16 %v1192
    %v1257 = vunpack.c.l.bf16 %v1193
    %v1258 = vunpack.c.l.bf16 %v1194
    %v1259 = vunpack.c.l.bf16 %v1195
    %v1260 = vunpack.c.l.bf16 %v1196
    %v1261 = vunpack.c.l.bf16 %v1197
    %v1262 = vunpack.c.l.bf16 %v1198
    %v1263 = vunpack.c.l.bf16 %v1199
    %v1264 = vunpack.c.l.bf16 %v1200
    %v1265 = vunpack.c.l.bf16 %v1201
    %v1266 = vunpack.c.l.bf16 %v1202
    %v1267 = vunpack.c.l.bf16 %v1203
    %v1268 = vunpack.c.l.bf16 %v1204
    %v1269 = vunpack.c.l.bf16 %v1205
    %v1270 = vunpack.c.l.bf16 %v1206
    %v1271 = vunpack.c.l.bf16 %v1207
    %v1272 = vunpack.c.l.bf16 %v1208
    %v1273 = vunpack.c.l.bf16 %v1209
    %v1274 = vunpack.c.l.bf16 %v1210
    %v1275 = vunpack.c.l.bf16 %v1211
    %v1276 = vunpack.c.l.bf16 %v1212
    %v1277 = vunpack.c.l.bf16 %v1213
    %v1278 = vunpack.c.l.bf16 %v1214
    %v1279 = vunpack.c.l.bf16 %v1215
    %v1280 = vunpack.c.l.bf16 %v1216
    %v1281 = vunpack.c.l.bf16 %v1217
    %v1282 = vunpack.c.l.bf16 %v1218
    %v1283 = vunpack.c.l.bf16 %v1219
    %v1284 = vunpack.c.l.bf16 %v1220
    %v1285 = vunpack.c.l.bf16 %v1221
    %v1286 = vunpack.c.l.bf16 %v1222
    %v1287 = vunpack.c.l.bf16 %v1223
    %v1288 = vunpack.c.l.bf16 %v1224
    %v1289 = vunpack.c.l.bf16 %v1225
    %v1290 = vunpack.c.l.bf16 %v1226
    %v1291 = vunpack.c.l.bf16 %v1227
    %v1292 = vunpack.c.l.bf16 %v1228
    %v1293 = vunpack.c.l.bf16 %v1229
    %v1294 = vunpack.c.l.bf16 %v1230
    %v1295 = vunpack.c.l.bf16 %v1231
    %v1296 = vunpack.c.l.bf16 %v1232
    %v1297 = vunpack.c.l.bf16 %v1233
    %v1298 = vunpack.c.l.bf16 %v1234
    %v1299 = vunpack.c.l.bf16 %v1235
    %v1300 = vunpack.c.l.bf16 %v1236
    %v1301 = vunpack.c.l.bf16 %v1237
    %v1302 = vunpack.c.l.bf16 %v1238
    %v1303 = vunpack.c.l.bf16 %v1239
    %v1304 = vunpack.c.l.bf16 %v1240
    %v1305 = vunpack.c.l.bf16 %v1241
    %v1306 = vunpack.c.l.bf16 %v1242
    %v1307 = vunpack.c.l.bf16 %v1243
    %v1308 = vunpack.c.l.bf16 %v1244
    %v1310 = vlaneseq
    %v1311 = vshrl.u32 %v1310, 7
    %v1312 = vsub.s32 0, %v1311
    %v1313 = vrot.slane %v1177, %v1312
    %v1315 = vmul.f32 %v1245, %v1313
    %v1316 = vmul.f32 %v1246, %v1313
    %v1317 = vmul.f32 %v1247, %v1313
    %v1318 = vmul.f32 %v1248, %v1313
    %v1319 = vmul.f32 %v1249, %v1313
    %v1320 = vmul.f32 %v1250, %v1313
    %v1321 = vmul.f32 %v1251, %v1313
    %v1322 = vmul.f32 %v1252, %v1313
    %v1323 = vmul.f32 %v1253, %v1313
    %v1324 = vmul.f32 %v1254, %v1313
    %v1325 = vmul.f32 %v1255, %v1313
    %v1326 = vmul.f32 %v1256, %v1313
    %v1327 = vmul.f32 %v1257, %v1313
    %v1328 = vmul.f32 %v1258, %v1313
    %v1329 = vmul.f32 %v1259, %v1313
    %v1330 = vmul.f32 %v1260, %v1313
    %v1331 = vmul.f32 %v1261, %v1313
    %v1332 = vmul.f32 %v1262, %v1313
    %v1333 = vmul.f32 %v1263, %v1313
    %v1334 = vmul.f32 %v1264, %v1313
    %v1335 = vmul.f32 %v1265, %v1313
    %v1336 = vmul.f32 %v1266, %v1313
    %v1337 = vmul.f32 %v1267, %v1313
    %v1338 = vmul.f32 %v1268, %v1313
    %v1339 = vmul.f32 %v1269, %v1313
    %v1340 = vmul.f32 %v1270, %v1313
    %v1341 = vmul.f32 %v1271, %v1313
    %v1342 = vmul.f32 %v1272, %v1313
    %v1343 = vmul.f32 %v1273, %v1313
    %v1344 = vmul.f32 %v1274, %v1313
    %v1345 = vmul.f32 %v1275, %v1313
    %v1346 = vmul.f32 %v1276, %v1313
    %v1347 = vmul.f32 %v1277, %v1313
    %v1348 = vmul.f32 %v1278, %v1313
    %v1349 = vmul.f32 %v1279, %v1313
    %v1350 = vmul.f32 %v1280, %v1313
    %v1351 = vmul.f32 %v1281, %v1313
    %v1352 = vmul.f32 %v1282, %v1313
    %v1353 = vmul.f32 %v1283, %v1313
    %v1354 = vmul.f32 %v1284, %v1313
    %v1355 = vmul.f32 %v1285, %v1313
    %v1356 = vmul.f32 %v1286, %v1313
    %v1357 = vmul.f32 %v1287, %v1313
    %v1358 = vmul.f32 %v1288, %v1313
    %v1359 = vmul.f32 %v1289, %v1313
    %v1360 = vmul.f32 %v1290, %v1313
    %v1361 = vmul.f32 %v1291, %v1313
    %v1362 = vmul.f32 %v1292, %v1313
    %v1363 = vmul.f32 %v1293, %v1313
    %v1364 = vmul.f32 %v1294, %v1313
    %v1365 = vmul.f32 %v1295, %v1313
    %v1366 = vmul.f32 %v1296, %v1313
    %v1367 = vmul.f32 %v1297, %v1313
    %v1368 = vmul.f32 %v1298, %v1313
    %v1369 = vmul.f32 %v1299, %v1313
    %v1370 = vmul.f32 %v1300, %v1313
    %v1371 = vmul.f32 %v1301, %v1313
    %v1372 = vmul.f32 %v1302, %v1313
    %v1373 = vmul.f32 %v1303, %v1313
    %v1374 = vmul.f32 %v1304, %v1313
    %v1375 = vmul.f32 %v1305, %v1313
    %v1376 = vmul.f32 %v1306, %v1313
    %v1377 = vmul.f32 %v1307, %v1313
    %v1378 = vmul.f32 %v1308, %v1313
    %v1380 = vlaneseq
    %v1381 = vshrl.u32 %v1380, 7
    %v1382 = vsub.s32 0, %v1381
    %v1383 = vrot.slane %v1180, %v1382
    %v1385 = vadd.f32 %v1315, %v1383
    %v1386 = vadd.f32 %v1316, %v1383
    %v1387 = vadd.f32 %v1317, %v1383
    %v1388 = vadd.f32 %v1318, %v1383
    %v1389 = vadd.f32 %v1319, %v1383
    %v1390 = vadd.f32 %v1320, %v1383
    %v1391 = vadd.f32 %v1321, %v1383
    %v1392 = vadd.f32 %v1322, %v1383
    %v1393 = vadd.f32 %v1323, %v1383
    %v1394 = vadd.f32 %v1324, %v1383
    %v1395 = vadd.f32 %v1325, %v1383
    %v1396 = vadd.f32 %v1326, %v1383
    %v1397 = vadd.f32 %v1327, %v1383
    %v1398 = vadd.f32 %v1328, %v1383
    %v1399 = vadd.f32 %v1329, %v1383
    %v1400 = vadd.f32 %v1330, %v1383
    %v1401 = vadd.f32 %v1331, %v1383
    %v1402 = vadd.f32 %v1332, %v1383
    %v1403 = vadd.f32 %v1333, %v1383
    %v1404 = vadd.f32 %v1334, %v1383
    %v1405 = vadd.f32 %v1335, %v1383
    %v1406 = vadd.f32 %v1336, %v1383
    %v1407 = vadd.f32 %v1337, %v1383
    %v1408 = vadd.f32 %v1338, %v1383
    %v1409 = vadd.f32 %v1339, %v1383
    %v1410 = vadd.f32 %v1340, %v1383
    %v1411 = vadd.f32 %v1341, %v1383
    %v1412 = vadd.f32 %v1342, %v1383
    %v1413 = vadd.f32 %v1343, %v1383
    %v1414 = vadd.f32 %v1344, %v1383
    %v1415 = vadd.f32 %v1345, %v1383
    %v1416 = vadd.f32 %v1346, %v1383
    %v1417 = vadd.f32 %v1347, %v1383
    %v1418 = vadd.f32 %v1348, %v1383
    %v1419 = vadd.f32 %v1349, %v1383
    %v1420 = vadd.f32 %v1350, %v1383
    %v1421 = vadd.f32 %v1351, %v1383
    %v1422 = vadd.f32 %v1352, %v1383
    %v1423 = vadd.f32 %v1353, %v1383
    %v1424 = vadd.f32 %v1354, %v1383
    %v1425 = vadd.f32 %v1355, %v1383
    %v1426 = vadd.f32 %v1356, %v1383
    %v1427 = vadd.f32 %v1357, %v1383
    %v1428 = vadd.f32 %v1358, %v1383
    %v1429 = vadd.f32 %v1359, %v1383
    %v1430 = vadd.f32 %v1360, %v1383
    %v1431 = vadd.f32 %v1361, %v1383
    %v1432 = vadd.f32 %v1362, %v1383
    %v1433 = vadd.f32 %v1363, %v1383
    %v1434 = vadd.f32 %v1364, %v1383
    %v1435 = vadd.f32 %v1365, %v1383
    %v1436 = vadd.f32 %v1366, %v1383
    %v1437 = vadd.f32 %v1367, %v1383
    %v1438 = vadd.f32 %v1368, %v1383
    %v1439 = vadd.f32 %v1369, %v1383
    %v1440 = vadd.f32 %v1370, %v1383
    %v1441 = vadd.f32 %v1371, %v1383
    %v1442 = vadd.f32 %v1372, %v1383
    %v1443 = vadd.f32 %v1373, %v1383
    %v1444 = vadd.f32 %v1374, %v1383
    %v1445 = vadd.f32 %v1375, %v1383
    %v1446 = vadd.f32 %v1376, %v1383
    %v1447 = vadd.f32 %v1377, %v1383
    %v1448 = vadd.f32 %v1378, %v1383
    %v1449 = vmax.f32 %v1385, 0.0
    %v1450 = vmax.f32 %v1386, 0.0
    %v1451 = vmax.f32 %v1387, 0.0
    %v1452 = vmax.f32 %v1388, 0.0
    %v1453 = vmax.f32 %v1389, 0.0
    %v1454 = vmax.f32 %v1390, 0.0
    %v1455 = vmax.f32 %v1391, 0.0
    %v1456 = vmax.f32 %v1392, 0.0
    %v1457 = vmax.f32 %v1393, 0.0
    %v1458 = vmax.f32 %v1394, 0.0
    %v1459 = vmax.f32 %v1395, 0.0
    %v1460 = vmax.f32 %v1396, 0.0
    %v1461 = vmax.f32 %v1397, 0.0
    %v1462 = vmax.f32 %v1398, 0.0
    %v1463 = vmax.f32 %v1399, 0.0
    %v1464 = vmax.f32 %v1400, 0.0
    %v1465 = vmax.f32 %v1401, 0.0
    %v1466 = vmax.f32 %v1402, 0.0
    %v1467 = vmax.f32 %v1403, 0.0
    %v1468 = vmax.f32 %v1404, 0.0
    %v1469 = vmax.f32 %v1405, 0.0
    %v1470 = vmax.f32 %v1406, 0.0
    %v1471 = vmax.f32 %v1407, 0.0
    %v1472 = vmax.f32 %v1408, 0.0
    %v1473 = vmax.f32 %v1409, 0.0
    %v1474 = vmax.f32 %v1410, 0.0
    %v1475 = vmax.f32 %v1411, 0.0
    %v1476 = vmax.f32 %v1412, 0.0
    %v1477 = vmax.f32 %v1413, 0.0
    %v1478 = vmax.f32 %v1414, 0.0
    %v1479 = vmax.f32 %v1415, 0.0
    %v1480 = vmax.f32 %v1416, 0.0
    %v1481 = vmax.f32 %v1417, 0.0
    %v1482 = vmax.f32 %v1418, 0.0
    %v1483 = vmax.f32 %v1419, 0.0
    %v1484 = vmax.f32 %v1420, 0.0
    %v1485 = vmax.f32 %v1421, 0.0
    %v1486 = vmax.f32 %v1422, 0.0
    %v1487 = vmax.f32 %v1423, 0.0
    %v1488 = vmax.f32 %v1424, 0.0
    %v1489 = vmax.f32 %v1425, 0.0
    %v1490 = vmax.f32 %v1426, 0.0
    %v1491 = vmax.f32 %v1427, 0.0
    %v1492 = vmax.f32 %v1428, 0.0
    %v1493 = vmax.f32 %v1429, 0.0
    %v1494 = vmax.f32 %v1430, 0.0
    %v1495 = vmax.f32 %v1431, 0.0
    %v1496 = vmax.f32 %v1432, 0.0
    %v1497 = vmax.f32 %v1433, 0.0
    %v1498 = vmax.f32 %v1434, 0.0
    %v1499 = vmax.f32 %v1435, 0.0
    %v1500 = vmax.f32 %v1436, 0.0
    %v1501 = vmax.f32 %v1437, 0.0
    %v1502 = vmax.f32 %v1438, 0.0
    %v1503 = vmax.f32 %v1439, 0.0
    %v1504 = vmax.f32 %v1440, 0.0
    %v1505 = vmax.f32 %v1441, 0.0
    %v1506 = vmax.f32 %v1442, 0.0
    %v1507 = vmax.f32 %v1443, 0.0
    %v1508 = vmax.f32 %v1444, 0.0
    %v1509 = vmax.f32 %v1445, 0.0
    %v1510 = vmax.f32 %v1446, 0.0
    %v1511 = vmax.f32 %v1447, 0.0
    %v1512 = vmax.f32 %v1448, 0.0
    %v1513 = vpack.c.bf16 %v1450, %v1449
    %v1514 = vpack.c.bf16 %v1452, %v1451
    %v1515 = vpack.c.bf16 %v1454, %v1453
    %v1516 = vpack.c.bf16 %v1456, %v1455
    %v1517 = vpack.c.bf16 %v1458, %v1457
    %v1518 = vpack.c.bf16 %v1460, %v1459
    %v1519 = vpack.c.bf16 %v1462, %v1461
    %v1520 = vpack.c.bf16 %v1464, %v1463
    %v1521 = vpack.c.bf16 %v1466, %v1465
    %v1522 = vpack.c.bf16 %v1468, %v1467
    %v1523 = vpack.c.bf16 %v1470, %v1469
    %v1524 = vpack.c.bf16 %v1472, %v1471
    %v1525 = vpack.c.bf16 %v1474, %v1473
    %v1526 = vpack.c.bf16 %v1476, %v1475
    %v1527 = vpack.c.bf16 %v1478, %v1477
    %v1528 = vpack.c.bf16 %v1480, %v1479
    %v1529 = vpack.c.bf16 %v1482, %v1481
    %v1530 = vpack.c.bf16 %v1484, %v1483
    %v1531 = vpack.c.bf16 %v1486, %v1485
    %v1532 = vpack.c.bf16 %v1488, %v1487
    %v1533 = vpack.c.bf16 %v1490, %v1489
    %v1534 = vpack.c.bf16 %v1492, %v1491
    %v1535 = vpack.c.bf16 %v1494, %v1493
    %v1536 = vpack.c.bf16 %v1496, %v1495
    %v1537 = vpack.c.bf16 %v1498, %v1497
    %v1538 = vpack.c.bf16 %v1500, %v1499
    %v1539 = vpack.c.bf16 %v1502, %v1501
    %v1540 = vpack.c.bf16 %v1504, %v1503
    %v1541 = vpack.c.bf16 %v1506, %v1505
    %v1542 = vpack.c.bf16 %v1508, %v1507
    %v1543 = vpack.c.bf16 %v1510, %v1509
    %v1544 = vpack.c.bf16 %v1512, %v1511
    %v1577 = vunpack.c.l.b16 %v1513
    %v1578 = vunpack.c.h.b16 %v1513
    %v1579 = vunpack.c.l.b16 %v1514
    %v1580 = vunpack.c.h.b16 %v1514
    %v1581 = vunpack.c.l.b16 %v1515
    %v1582 = vunpack.c.h.b16 %v1515
    %v1583 = vunpack.c.l.b16 %v1516
    %v1584 = vunpack.c.h.b16 %v1516
    %v1585 = vunpack.c.l.b16 %v1517
    %v1586 = vunpack.c.h.b16 %v1517
    %v1587 = vunpack.c.l.b16 %v1518
    %v1588 = vunpack.c.h.b16 %v1518
    %v1589 = vunpack.c.l.b16 %v1519
    %v1590 = vunpack.c.h.b16 %v1519
    %v1591 = vunpack.c.l.b16 %v1520
    %v1592 = vunpack.c.h.b16 %v1520
    %v1593 = vunpack.c.l.b16 %v1521
    %v1594 = vunpack.c.h.b16 %v1521
    %v1595 = vunpack.c.l.b16 %v1522
    %v1596 = vunpack.c.h.b16 %v1522
    %v1597 = vunpack.c.l.b16 %v1523
    %v1598 = vunpack.c.h.b16 %v1523
    %v1599 = vunpack.c.l.b16 %v1524
    %v1600 = vunpack.c.h.b16 %v1524
    %v1601 = vunpack.c.l.b16 %v1525
    %v1602 = vunpack.c.h.b16 %v1525
    %v1603 = vunpack.c.l.b16 %v1526
    %v1604 = vunpack.c.h.b16 %v1526
    %v1605 = vunpack.c.l.b16 %v1527
    %v1606 = vunpack.c.h.b16 %v1527
    %v1607 = vunpack.c.l.b16 %v1528
    %v1608 = vunpack.c.h.b16 %v1528
    %v1609 = vunpack.c.l.b16 %v1529
    %v1610 = vunpack.c.h.b16 %v1529
    %v1611 = vunpack.c.l.b16 %v1530
    %v1612 = vunpack.c.h.b16 %v1530
    %v1613 = vunpack.c.l.b16 %v1531
    %v1614 = vunpack.c.h.b16 %v1531
    %v1615 = vunpack.c.l.b16 %v1532
    %v1616 = vunpack.c.h.b16 %v1532
    %v1617 = vunpack.c.l.b16 %v1533
    %v1618 = vunpack.c.h.b16 %v1533
    %v1619 = vunpack.c.l.b16 %v1534
    %v1620 = vunpack.c.h.b16 %v1534
    %v1621 = vunpack.c.l.b16 %v1535
    %v1622 = vunpack.c.h.b16 %v1535
    %v1623 = vunpack.c.l.b16 %v1536
    %v1624 = vunpack.c.h.b16 %v1536
    %v1625 = vunpack.c.l.b16 %v1537
    %v1626 = vunpack.c.h.b16 %v1537
    %v1627 = vunpack.c.l.b16 %v1538
    %v1628 = vunpack.c.h.b16 %v1538
    %v1629 = vunpack.c.l.b16 %v1539
    %v1630 = vunpack.c.h.b16 %v1539
    %v1631 = vunpack.c.l.b16 %v1540
    %v1632 = vunpack.c.h.b16 %v1540
    %v1633 = vunpack.c.l.b16 %v1541
    %v1634 = vunpack.c.h.b16 %v1541
    %v1635 = vunpack.c.l.b16 %v1542
    %v1636 = vunpack.c.h.b16 %v1542
    %v1637 = vunpack.c.l.b16 %v1543
    %v1638 = vunpack.c.h.b16 %v1543
    %v1639 = vunpack.c.l.b16 %v1544
    %v1640 = vunpack.c.h.b16 %v1544
    %v1641 = vpack.c.b16 %v1577, %v1577
    %v1642 = vpack.c.b16 %v1578, %v1578
    %v1643 = vpack.c.b16 %v1579, %v1579
    %v1644 = vpack.c.b16 %v1580, %v1580
    %v1645 = vpack.c.b16 %v1581, %v1581
    %v1646 = vpack.c.b16 %v1582, %v1582
    %v1647 = vpack.c.b16 %v1583, %v1583
    %v1648 = vpack.c.b16 %v1584, %v1584
    %v1649 = vpack.c.b16 %v1585, %v1585
    %v1650 = vpack.c.b16 %v1586, %v1586
    %v1651 = vpack.c.b16 %v1587, %v1587
    %v1652 = vpack.c.b16 %v1588, %v1588
    %v1653 = vpack.c.b16 %v1589, %v1589
    %v1654 = vpack.c.b16 %v1590, %v1590
    %v1655 = vpack.c.b16 %v1591, %v1591
    %v1656 = vpack.c.b16 %v1592, %v1592
    %v1657 = vpack.c.b16 %v1593, %v1593
    %v1658 = vpack.c.b16 %v1594, %v1594
    %v1659 = vpack.c.b16 %v1595, %v1595
    %v1660 = vpack.c.b16 %v1596, %v1596
    %v1661 = vpack.c.b16 %v1597, %v1597
    %v1662 = vpack.c.b16 %v1598, %v1598
    %v1663 = vpack.c.b16 %v1599, %v1599
    %v1664 = vpack.c.b16 %v1600, %v1600
    %v1665 = vpack.c.b16 %v1601, %v1601
    %v1666 = vpack.c.b16 %v1602, %v1602
    %v1667 = vpack.c.b16 %v1603, %v1603
    %v1668 = vpack.c.b16 %v1604, %v1604
    %v1669 = vpack.c.b16 %v1605, %v1605
    %v1670 = vpack.c.b16 %v1606, %v1606
    %v1671 = vpack.c.b16 %v1607, %v1607
    %v1672 = vpack.c.b16 %v1608, %v1608
    %v1673 = vpack.c.b16 %v1609, %v1609
    %v1674 = vpack.c.b16 %v1610, %v1610
    %v1675 = vpack.c.b16 %v1611, %v1611
    %v1676 = vpack.c.b16 %v1612, %v1612
    %v1677 = vpack.c.b16 %v1613, %v1613
    %v1678 = vpack.c.b16 %v1614, %v1614
    %v1679 = vpack.c.b16 %v1615, %v1615
    %v1680 = vpack.c.b16 %v1616, %v1616
    %v1681 = vpack.c.b16 %v1617, %v1617
    %v1682 = vpack.c.b16 %v1618, %v1618
    %v1683 = vpack.c.b16 %v1619, %v1619
    %v1684 = vpack.c.b16 %v1620, %v1620
    %v1685 = vpack.c.b16 %v1621, %v1621
    %v1686 = vpack.c.b16 %v1622, %v1622
    %v1687 = vpack.c.b16 %v1623, %v1623
    %v1688 = vpack.c.b16 %v1624, %v1624
    %v1689 = vpack.c.b16 %v1625, %v1625
    %v1690 = vpack.c.b16 %v1626, %v1626
    %v1691 = vpack.c.b16 %v1627, %v1627
    %v1692 = vpack.c.b16 %v1628, %v1628
    %v1693 = vpack.c.b16 %v1629, %v1629
    %v1694 = vpack.c.b16 %v1630, %v1630
    %v1695 = vpack.c.b16 %v1631, %v1631
    %v1696 = vpack.c.b16 %v1632, %v1632
    %v1697 = vpack.c.b16 %v1633, %v1633
    %v1698 = vpack.c.b16 %v1634, %v1634
    %v1699 = vpack.c.b16 %v1635, %v1635
    %v1700 = vpack.c.b16 %v1636, %v1636
    %v1701 = vpack.c.b16 %v1637, %v1637
    %v1702 = vpack.c.b16 %v1638, %v1638
    %v1703 = vpack.c.b16 %v1639, %v1639
    %v1704 = vpack.c.b16 %v1640, %v1640
    %1769 = vst [vmem:[%s4] sm:$0xf] %v1641
    %1770 = vst [vmem:[%s4 + $0x4] sm:$0xf] %v1642
    %1771 = vst [vmem:[%s4 + $0x8] sm:$0xf] %v1643
    %1772 = vst [vmem:[%s4 + $0xc] sm:$0xf] %v1644
    %1773 = vst [vmem:[%s4 + $0x10] sm:$0xf] %v1645
    %1774 = vst [vmem:[%s4 + $0x14] sm:$0xf] %v1646
    %1775 = vst [vmem:[%s4 + $0x18] sm:$0xf] %v1647
    %1776 = vst [vmem:[%s4 + $0x1c] sm:$0xf] %v1648
    %1777 = vst [vmem:[%s4 + $0x20] sm:$0xf] %v1649
    %1778 = vst [vmem:[%s4 + $0x24] sm:$0xf] %v1650
    %1779 = vst [vmem:[%s4 + $0x28] sm:$0xf] %v1651
    %1780 = vst [vmem:[%s4 + $0x2c] sm:$0xf] %v1652
    %1781 = vst [vmem:[%s4 + $0x30] sm:$0xf] %v1653
    %1782 = vst [vmem:[%s4 + $0x34] sm:$0xf] %v1654
    %1783 = vst [vmem:[%s4 + $0x38] sm:$0xf] %v1655
    %1784 = vst [vmem:[%s4 + $0x3c] sm:$0xf] %v1656
    %1785 = vst [vmem:[%s4 + $0x40] sm:$0xf] %v1657
    %1786 = vst [vmem:[%s4 + $0x44] sm:$0xf] %v1658
    %1787 = vst [vmem:[%s4 + $0x48] sm:$0xf] %v1659
    %1788 = vst [vmem:[%s4 + $0x4c] sm:$0xf] %v1660
    %1789 = vst [vmem:[%s4 + $0x50] sm:$0xf] %v1661
    %1790 = vst [vmem:[%s4 + $0x54] sm:$0xf] %v1662
    %1791 = vst [vmem:[%s4 + $0x58] sm:$0xf] %v1663
    %1792 = vst [vmem:[%s4 + $0x5c] sm:$0xf] %v1664
    %1793 = vst [vmem:[%s4 + $0x60] sm:$0xf] %v1665
    %1794 = vst [vmem:[%s4 + $0x64] sm:$0xf] %v1666
    %1795 = vst [vmem:[%s4 + $0x68] sm:$0xf] %v1667
    %1796 = vst [vmem:[%s4 + $0x6c] sm:$0xf] %v1668
    %1797 = vst [vmem:[%s4 + $0x70] sm:$0xf] %v1669
    %1798 = vst [vmem:[%s4 + $0x74] sm:$0xf] %v1670
    %1799 = vst [vmem:[%s4 + $0x78] sm:$0xf] %v1671
    %1800 = vst [vmem:[%s4 + $0x7c] sm:$0xf] %v1672
    %1801 = vst [vmem:[%s4 + $0x80] sm:$0xf] %v1673
    %1802 = vst [vmem:[%s4 + $0x84] sm:$0xf] %v1674
    %1803 = vst [vmem:[%s4 + $0x88] sm:$0xf] %v1675
    %1804 = vst [vmem:[%s4 + $0x8c] sm:$0xf] %v1676
    %1805 = vst [vmem:[%s4 + $0x90] sm:$0xf] %v1677
    %1806 = vst [vmem:[%s4 + $0x94] sm:$0xf] %v1678
    %1807 = vst [vmem:[%s4 + $0x98] sm:$0xf] %v1679
    %1808 = vst [vmem:[%s4 + $0x9c] sm:$0xf] %v1680
    %1809 = vst [vmem:[%s4 + $0xa0] sm:$0xf] %v1681
    %1810 = vst [vmem:[%s4 + $0xa4] sm:$0xf] %v1682
    %1811 = vst [vmem:[%s4 + $0xa8] sm:$0xf] %v1683
    %1812 = vst [vmem:[%s4 + $0xac] sm:$0xf] %v1684
    %1813 = vst [vmem:[%s4 + $0xb0] sm:$0xf] %v1685
    %1814 = vst [vmem:[%s4 + $0xb4] sm:$0xf] %v1686
    %1815 = vst [vmem:[%s4 + $0xb8] sm:$0xf] %v1687
    %1816 = vst [vmem:[%s4 + $0xbc] sm:$0xf] %v1688
    %1817 = vst [vmem:[%s4 + $0xc0] sm:$0xf] %v1689
    %1818 = vst [vmem:[%s4 + $0xc4] sm:$0xf] %v1690
    %1819 = vst [vmem:[%s4 + $0xc8] sm:$0xf] %v1691
    %1820 = vst [vmem:[%s4 + $0xcc] sm:$0xf] %v1692
    %1821 = vst [vmem:[%s4 + $0xd0] sm:$0xf] %v1693
    %1822 = vst [vmem:[%s4 + $0xd4] sm:$0xf] %v1694
    %1823 = vst [vmem:[%s4 + $0xd8] sm:$0xf] %v1695
    %1824 = vst [vmem:[%s4 + $0xdc] sm:$0xf] %v1696
    %1825 = vst [vmem:[%s4 + $0xe0] sm:$0xf] %v1697
    %1826 = vst [vmem:[%s4 + $0xe4] sm:$0xf] %v1698
    %1827 = vst [vmem:[%s4 + $0xe8] sm:$0xf] %v1699
    %1828 = vst [vmem:[%s4 + $0xec] sm:$0xf] %v1700
    %1829 = vst [vmem:[%s4 + $0xf0] sm:$0xf] %v1701
    %1830 = vst [vmem:[%s4 + $0xf4] sm:$0xf] %v1702
    %1831 = vst [vmem:[%s4 + $0xf8] sm:$0xf] %v1703
    %1832 = vst [vmem:[%s4 + $0xfc] sm:$0xf] %v1704
  $region25: #{double_conv.2} parent=0 // pred_fallthru
    _
  // Predicated region
  $region26: #{double_conv.2} parent=0 // pred_check
    _
  $region27: #{double_conv.2} parent=0 // pred_check_branch
    %1834 = sbr.rel (0) target = $region29
  $region28: #{double_conv.2} parent=0 // pred_region
    _
  $region29: #{double_conv.2} parent=0 // pred_fallthru
    _
  // Predicated region
  $region30: #{double_conv.2} parent=0 // pred_check
    _
  $region31: #{double_conv.2} parent=0 // pred_check_branch
    %1836 = sbr.rel (0) target = $region33
  $region32: #{double_conv.2} parent=0 // pred_region
    _
  $region33: #{double_conv.2} parent=0 // pred_fallthru
    _

</llo_original>
